<compile_context>
chip_gen: v7x
topology: tpu7x:2x2x1
jax: 0.10.0
libtpu: 0.0.40
codegen_flags: <defaults>
</compile_context>

<pallas_src>
import functools
import math

import jax
import jax.numpy as jnp
from jax.experimental import pallas as pl
from jax.experimental.pallas import tpu as pltpu

_BN_EPS = 1e-5
_LEAKY_SLOPE = 0.01  # nn.LeakyReLU() default, as used by DecConvBlock


# ---------------------------------------------------------------------------
# In-kernel building blocks
# ---------------------------------------------------------------------------
def _conv1d_k3(x, w_taps, bias=None):
    """k=3 / pad=1 temporal conv as three per-tap MXU dots (no im2col tensor).

    x:      (tb, T, C)   f32 activation tile (VMEM).
    w_taps: (3, C, Co)   bf16 weights; tap k multiplies x[t + k - 1].
    bias:   (1, 1, Co)   f32 or None.
    Returns (tb, T, Co)  f32 (f32 MXU accumulation).

    Shifted views are built with one zero row + sublane slab copy each, so the
    (B, T, 3C) lane-axis im2col of the previous version never exists.
    NOTE: on v5e/v6e with 3*C >= 128 the fold-into-K im2col (strided writes
    into a reused VMEM scratch) can be preferable; the 3-dot accumulated form
    below is the right shape for v7x's MRB in-place accumulation.
    """
    tb, T, C = x.shape
    Co = w_taps.shape[-1]
    z = jnp.zeros((tb, 1, C), x.dtype)
    x_prev = jnp.concatenate([z, x[:, : T - 1, :]], axis=1)  # x[t-1], 0 at t=0
    x_next = jnp.concatenate([x[:, 1:, :], z], axis=1)       # x[t+1], 0 at T-1

    def tap(a, w):
        # Flatten to (tb*T, C): one tall MXU matmul instead of tb small ones.
        return jax.lax.dot_general(
            a.reshape(tb * T, C).astype(jnp.bfloat16), w,
            dimension_numbers=(((1,), (0,)), ((), ())),
            preferred_element_type=jnp.float32)

    acc = tap(x_prev, w_taps[0]) + tap(x, w_taps[1]) + tap(x_next, w_taps[2])
    y = acc.reshape(tb, T, Co)
    if bias is not None:
        y = y + bias
    return y


def _bn_lrelu_conv2(h, stats, gamma, beta, w2_taps, b2):
    """Combine per-tile BN stats, normalize + LeakyReLU (one FMA + select),
    then conv2.  h: (tb, T, Ch) f32, stats: (nb, 2, Ch) f32."""
    tb, T, _ = h.shape
    nb = stats.shape[0]
    n_tile = tb * T
    n_total = n_tile * nb

    means = stats[:, 0:1, :]                    # (nb, 1, Ch) tile means
    m2s = stats[:, 1:2, :]                      # (nb, 1, Ch) centered sum-sq
    gmean = jnp.sum(means, axis=0, keepdims=True) * (1.0 / nb)
    dm = means - gmean
    gm2 = (jnp.sum(m2s, axis=0, keepdims=True)
           + n_tile * jnp.sum(dm * dm, axis=0, keepdims=True))
    var = gm2 * (1.0 / n_total)                 # biased var, as PyTorch BN uses

    scale = gamma * jax.lax.rsqrt(var + _BN_EPS)   # (1, 1, Ch), rsqrt on EUP
    shift = beta - gmean * scale
    hn = h * scale + shift                          # BN affine folded to one FMA
    hn = jnp.where(hn > 0, hn, _LEAKY_SLOPE * hn)   # LeakyReLU
    return _conv1d_k3(hn, w2_taps, b2)


# ---------------------------------------------------------------------------
# Kernels
# ---------------------------------------------------------------------------
def _conv1_stats_kernel(x_ref, w1_ref, h_ref, stats_ref):
    # conv1 bias intentionally dropped: cancelled by training-mode BN mean.
    h = _conv1d_k3(x_ref[...], w1_ref[...])
    h_ref[...] = h.astype(h_ref.dtype)
    n = h.shape[0] * h.shape[1]
    m = jnp.sum(h, axis=(0, 1), keepdims=True) * (1.0 / n)      # (1, 1, Ch)
    c = h - m
    m2 = jnp.sum(c * c, axis=(0, 1), keepdims=True)             # (1, 1, Ch)
    stats_ref[...] = jnp.concatenate([m, m2], axis=1).astype(stats_ref.dtype)


def _bn_conv2_kernel(h_ref, stats_ref, gamma_ref, beta_ref, w2_ref, b2_ref,
                     out_ref):
    y = _bn_lrelu_conv2(h_ref[...], stats_ref[...], gamma_ref[...],
                        beta_ref[...], w2_ref[...], b2_ref[...])
    out_ref[...] = y.astype(out_ref.dtype)


def _bn_conv2_residual_kernel(h_ref, stats_ref, y_ref, xres_ref, gamma_ref,
                              beta_ref, w2_ref, b2_ref, out_ref):
    # Fused DecConvBlock epilogue: out = x + y + gen_block(y).
    g = _bn_lrelu_conv2(h_ref[...], stats_ref[...], gamma_ref[...],
                        beta_ref[...], w2_ref[...], b2_ref[...])
    out_ref[...] = (xres_ref[...] + y_ref[...] + g).astype(out_ref.dtype)


# ---------------------------------------------------------------------------
# pallas_call wrappers
# ---------------------------------------------------------------------------
def _round_up(v, m):
    return -(-v // m) * m


def _pick_batch_tile(B, T, c_in, c_h, budget_bytes=4 << 20):
    """Largest batch tile whose working set fits a modest VMEM budget, while
    keeping >= 2 grid steps when possible (v7x megacore + pipelining)."""
    lane = _round_up(c_in, 128) + _round_up(c_h, 128)
    per_sample = _round_up(T, 8) * lane * 4 * 8   # ~8 live f32 slabs / sample
    tb = max(1, min(B, budget_bytes // max(per_sample, 1)))
    if B >= 2:
        tb = min(tb, B // 2)
    while B % tb:
        tb -= 1
    return tb


def _compiler_params(tb, T, c_in, c_h):
    # Generation-aware VMEM limit: never below the 32 MiB default scoped
    # limit, never above ~3/4 of physical VMEM (only 64 MiB/core on v7x).
    try:
        cap = int(pltpu.get_tpu_info().vmem_capacity_bytes)
    except Exception:  # conservative fallback == v7x per-core VMEM
        cap = 64 << 20
    lane = _round_up(c_in, 128) + _round_up(c_h, 128)
    per_step = _round_up(tb * T, 8) * lane * 4 * 8
    limit = min(max(32 << 20, 2 * per_step), (cap * 3) // 4)
    return pltpu.CompilerParams(dimension_semantics=("parallel",),
                                vmem_limit_bytes=int(limit))


def _block_pass1(x_btc, w1_taps, tb):
    """conv1 + per-tile BN statistics.  Returns (h, stats)."""
    B, T, c_in = x_btc.shape
    c_h = w1_taps.shape[-1]
    nb = B // tb
    return pl.pallas_call(
        _conv1_stats_kernel,
        grid=(nb,),
        in_specs=[
            pl.BlockSpec((tb, T, c_in), lambda b: (b, 0, 0)),
            pl.BlockSpec((3, c_in, c_h), lambda b: (0, 0, 0)),
        ],
        out_specs=[
            pl.BlockSpec((tb, T, c_h), lambda b: (b, 0, 0)),
            pl.BlockSpec((1, 2, c_h), lambda b: (b, 0, 0)),
        ],
        out_shape=[
            jax.ShapeDtypeStruct((B, T, c_h), jnp.float32),
            jax.ShapeDtypeStruct((nb, 2, c_h), jnp.float32),
        ],
        compiler_params=_compiler_params(tb, T, c_in, c_h),
    )(x_btc, w1_taps)


def _block_pass2(h, stats, params, tb):
    """BatchNorm(normalize) + LeakyReLU + conv2."""
    B, T, c_h = h.shape
    c_in = params["w2"].shape[-1]
    nb = B // tb
    return pl.pallas_call(
        _bn_conv2_kernel,
        grid=(nb,),
        in_specs=[
            pl.BlockSpec((tb, T, c_h), lambda b: (b, 0, 0)),
            pl.BlockSpec((nb, 2, c_h), lambda b: (0, 0, 0)),
            pl.BlockSpec((1, 1, c_h), lambda b: (0, 0, 0)),
            pl.BlockSpec((1, 1, c_h), lambda b: (0, 0, 0)),
            pl.BlockSpec((3, c_h, c_in), lambda b: (0, 0, 0)),
            pl.BlockSpec((1, 1, c_in), lambda b: (0, 0, 0)),
        ],
        out_specs=pl.BlockSpec((tb, T, c_in), lambda b: (b, 0, 0)),
        out_shape=jax.ShapeDtypeStruct((B, T, c_in), jnp.float32),
        compiler_params=_compiler_params(tb, T, c_in, c_h),
    )(h, stats, params["gamma"], params["beta"], params["w2"], params["b2"])


def _block_pass2_residual(h, stats, y, x_res, params, tb):
    """Fused epilogue: out = x_res + y + conv2(lrelu(bn(h)))."""
    B, T, c_h = h.shape
    c_in = params["w2"].shape[-1]
    nb = B // tb
    return pl.pallas_call(
        _bn_conv2_residual_kernel,
        grid=(nb,),
        in_specs=[
            pl.BlockSpec((tb, T, c_h), lambda b: (b, 0, 0)),
            pl.BlockSpec((nb, 2, c_h), lambda b: (0, 0, 0)),
            pl.BlockSpec((tb, T, c_in), lambda b: (b, 0, 0)),
            pl.BlockSpec((tb, T, c_in), lambda b: (b, 0, 0)),
            pl.BlockSpec((1, 1, c_h), lambda b: (0, 0, 0)),
            pl.BlockSpec((1, 1, c_h), lambda b: (0, 0, 0)),
            pl.BlockSpec((3, c_h, c_in), lambda b: (0, 0, 0)),
            pl.BlockSpec((1, 1, c_in), lambda b: (0, 0, 0)),
        ],
        out_specs=pl.BlockSpec((tb, T, c_in), lambda b: (b, 0, 0)),
        out_shape=jax.ShapeDtypeStruct((B, T, c_in), jnp.float32),
        compiler_params=_compiler_params(tb, T, c_in, c_h),
    )(h, stats, y, x_res, params["gamma"], params["beta"], params["w2"],
      params["b2"])


# ---------------------------------------------------------------------------
# DecConvBlock forward
# ---------------------------------------------------------------------------
def _nearest_interp_btc(x, scale):
    """F.interpolate(mode='nearest') along T for (B, T, C); exact int math."""
    B, T, C = x.shape
    out_t = int(math.floor(T * scale))
    if out_t == T:
        return x
    if out_t % T == 0:  # integer factor: broadcast+reshape repeat, no gather
        s = out_t // T
        return jnp.broadcast_to(x[:, :, None, :], (B, T, s, C)).reshape(B, out_t, C)
    idx = (jnp.arange(out_t, dtype=jnp.int32) * T) // out_t
    return jnp.take(x, idx, axis=1)


def _dec_conv_block_btc(x_btc, dec_params, gen_params, upsample):
    """DecConvBlock forward in (B, T, C) layout (preferred: no transposes)."""
    B, T, c_in = x_btc.shape
    c_h = dec_params["gamma"].shape[-1]
    tb = _pick_batch_tile(B, T, c_in, c_h)

    # y = dec_block(x)
    h, st = _block_pass1(x_btc, dec_params["w1"], tb)
    y = _block_pass2(h, st, dec_params, tb)

    x_res = x_btc
    if upsample > 1.0:
        # TODO(synk): for integer factors, fold the repeat into the gen-block
        # kernels (input index = output index // scale) so the upsampled
        # activations never round-trip HBM.
        x_res = _nearest_interp_btc(x_res, upsample)
        y = _nearest_interp_btc(y, upsample)

    # out = x + y + gen_block(y); residual adds fused into the last kernel.
    hg, stg = _block_pass1(y, gen_params["w1"], tb)
    return _block_pass2_residual(hg, stg, y, x_res, gen_params, tb)


@functools.partial(jax.jit, static_argnames=("upsample",))
def dec_conv_block_btc(x_btc, dec_params, gen_params, upsample=1.0):
    return _dec_conv_block_btc(x_btc, dec_params, gen_params, upsample)


@functools.partial(jax.jit, static_argnames=("upsample",))
def dec_conv_block(x_bct, dec_params, gen_params, upsample=1.0):
    """PyTorch-layout forward; x_bct is (B, c_in, T) (Conv1d NCL layout).

    Prefer dec_conv_block_btc from a (B, T, C)-native model to avoid the two
    boundary transposes (extra HBM round trips of the activation).
    """
    x = jnp.transpose(x_bct, (0, 2, 1))
    out = _dec_conv_block_btc(x, dec_params, gen_params, upsample)
    return jnp.transpose(out, (0, 2, 1))


# ---------------------------------------------------------------------------
# Parameter init (mirrors the PyTorch module's init; weights as bf16 taps)
# ---------------------------------------------------------------------------
def _xavier_uniform_conv(key, c_out, c_in, ksize):
    # torch.nn.init.xavier_uniform_ with gain('linear') == 1.0 on (c_out, c_in, k)
    fan_in, fan_out = c_in * ksize, c_out * ksize
    a = math.sqrt(6.0 / (fan_in + fan_out))
    return jax.random.uniform(key, (c_out, c_in, ksize), jnp.float32, -a, a)


def _to_tap_weight(w_ock):
    # torch layout (c_out, c_in, k) -> (k, c_in, c_out); bf16 MXU operands,
    # the kernels accumulate in f32 via preferred_element_type.
    return jnp.transpose(w_ock, (2, 1, 0)).astype(jnp.bfloat16)


def _conv_bias(key, c_out, c_in, ksize):
    bound = 1.0 / math.sqrt(c_in * ksize)
    return jax.random.uniform(key, (1, 1, c_out), jnp.float32, -bound, bound)


def init_block_params(key, c_in, c_h):
    k1, k2, k3 = jax.random.split(key, 3)
    return {
        # conv1 bias intentionally omitted: a per-channel constant before
        # training-mode BatchNorm is cancelled exactly by the mean subtraction.
        "w1": _to_tap_weight(_xavier_uniform_conv(k1, c_h, c_in, 3)),
        "gamma": jnp.ones((1, 1, c_h), jnp.float32),
        "beta": jnp.zeros((1, 1, c_h), jnp.float32),
        "w2": _to_tap_weight(_xavier_uniform_conv(k2, c_in, c_h, 3)),
        "b2": _conv_bias(k3, c_in, c_h, 3),
    }


# ---------------------------------------------------------------------------
# Pure-JAX reference (same bf16-operand / f32-accumulate numerics)
# TODO(synk): BatchNorm running-stat (momentum) buffers and eval() mode are
# not modeled; forward uses training-mode batch statistics like the reference.
# ---------------------------------------------------------------------------
def _ref_conv1d_k3(x, w_taps, bias=None):
    T = x.shape[1]
    xp = jnp.pad(x, ((0, 0), (1, 1), (0, 0)))

    def tap(a, w):
        return jnp.einsum("btc,co->bto", a.astype(jnp.bfloat16), w,
                          preferred_element_type=jnp.float32)

    y = (tap(xp[:, 0:T], w_taps[0]) + tap(xp[:, 1:T + 1], w_taps[1])
         + tap(xp[:, 2:T + 2], w_taps[2]))
    return y if bias is None else y + bias


def _ref_block(x, p):
    h = _ref_conv1d_k3(x, p["w1"])
    mean = jnp.mean(h, axis=(0, 1), keepdims=True)
    var = jnp.mean(jnp.square(h - mean), axis=(0, 1), keepdims=True)
    hn = (h - mean) * jax.lax.rsqrt(var + _BN_EPS) * p["gamma"] + p["beta"]
    hn = jnp.where(hn > 0, hn, _LEAKY_SLOPE * hn)
    return _ref_conv1d_k3(hn, p["w2"], p["b2"])


def _ref_dec_conv_block(x_bct, dec_params, gen_params, upsample):
    x = jnp.transpose(x_bct, (0, 2, 1))
    y = _ref_block(x, dec_params)
    if upsample > 1.0:
        x = _nearest_interp_btc(x, upsample)
        y = _nearest_interp_btc(y, upsample)
    out = x + y + _ref_block(y, gen_params)
    return jnp.transpose(out, (0, 2, 1))


if __name__ == "__main__":
    B, C_IN, C_H, T = 2, 4, 8, 16
    key = jax.random.PRNGKey(0)
    kx, kd, kg = jax.random.split(key, 3)

    x = jax.random.normal(kx, (B, C_IN, T), jnp.float32)
    dec_params = init_block_params(kd, C_IN, C_H)
    gen_params = init_block_params(kg, C_IN, C_H)

    out = dec_conv_block(x, dec_params, gen_params, upsample=1.0)
    out = jax.block_until_ready(out)
    assert out.shape == (B, C_IN, T) and out.dtype == jnp.float32
    assert bool(jnp.all(jnp.isfinite(out)))
    ref = _ref_dec_conv_block(x, dec_params, gen_params, 1.0)
    assert bool(jnp.allclose(out, ref, atol=1e-2, rtol=1e-2)), (
        float(jnp.max(jnp.abs(out - ref))))

    out_up = dec_conv_block(x, dec_params, gen_params, upsample=2.0)
    out_up = jax.block_until_ready(out_up)
    assert out_up.shape == (B, C_IN, 2 * T) and out_up.dtype == jnp.float32
    assert bool(jnp.all(jnp.isfinite(out_up)))
    ref_up = _ref_dec_conv_block(x, dec_params, gen_params, 2.0)
    assert bool(jnp.allclose(out_up, ref_up, atol=1e-2, rtol=1e-2)), (
        float(jnp.max(jnp.abs(out_up - ref_up))))

    print("KERNEL_OK")
</pallas_src>

<mosaic_0001>
module attributes {stable_mosaic.version = 11 : i64} {
  func.func @_conv1_stats_kernel(%arg0: i32, %arg1: memref<1x16x4xf32, #tpu.memory_space<vmem>>, %arg2: memref<3x4x8xbf16, #tpu.memory_space<vmem>>, %arg3: memref<1x16x8xf32, #tpu.memory_space<vmem>>, %arg4: memref<1x2x8xf32, #tpu.memory_space<vmem>>) attributes {dimension_semantics = [#tpu.dimension_semantics<parallel>], iteration_bounds = array<i64: 2>, scalar_prefetch = 0 : i64, scratch_operands = 0 : i64, tpu.core_type = #tpu.core_type<tc>, window_params = [{transform_indices = @transform_0, window_bounds = array<i64: 1, 16, 4>}, {pipeline_mode = #tpu.pipeline_mode<synchronous>, transform_indices = @transform_1, window_bounds = array<i64: 3, 4, 8>}, {transform_indices = @transform_2, window_bounds = array<i64: 1, 16, 8>}, {transform_indices = @transform_3, window_bounds = array<i64: 1, 2, 8>}]} {
    %c0 = arith.constant 0 : index
    %c0_0 = arith.constant 0 : index
    %c0_1 = arith.constant 0 : index
    %0 = vector.load %arg1[%c0, %c0_0, %c0_1] : memref<1x16x4xf32, #tpu.memory_space<vmem>>, vector<1x16x4xf32>
    %c0_2 = arith.constant 0 : index
    %c0_3 = arith.constant 0 : index
    %c0_4 = arith.constant 0 : index
    %1 = vector.load %arg2[%c0_2, %c0_3, %c0_4] : memref<3x4x8xbf16, #tpu.memory_space<vmem>>, vector<3x4x8xbf16>
    %cst = arith.constant 0.000000e+00 : f32
    %2 = vector.broadcast %cst : f32 to vector<1x1x4xf32>
    %3 = vector.extract_strided_slice %0 {offsets = [0, 0, 0], sizes = [1, 15, 4], strides = [1, 1, 1]} : vector<1x16x4xf32> to vector<1x15x4xf32>
    %4 = tpu.concatenate %2, %3 in 1 : vector<1x1x4xf32>, vector<1x15x4xf32> -> vector<1x16x4xf32>
    %5 = vector.extract_strided_slice %0 {offsets = [0, 1, 0], sizes = [1, 15, 4], strides = [1, 1, 1]} : vector<1x16x4xf32> to vector<1x15x4xf32>
    %6 = tpu.concatenate %5, %2 in 1 : vector<1x15x4xf32>, vector<1x1x4xf32> -> vector<1x16x4xf32>
    %7 = vector.extract_strided_slice %1 {offsets = [0, 0, 0], sizes = [1, 4, 8], strides = [1, 1, 1]} : vector<3x4x8xbf16> to vector<1x4x8xbf16>
    %8 = vector.shape_cast %7 : vector<1x4x8xbf16> to vector<4x8xbf16>
    %9 = vector.shape_cast %4 : vector<1x16x4xf32> to vector<16x4xf32>
    %10 = arith.truncf %9 : vector<16x4xf32> to vector<16x4xbf16>
    %cst_5 = arith.constant dense<0.000000e+00> : vector<16x8xf32>
    %11 = tpu.matmul %10, %8, %cst_5 {dimension_numbers = #tpu.dot_dimension_numbers<[1], [0], [0], [1], [0, 0, 1, 1], [], []>} : vector<16x4xbf16>, vector<4x8xbf16>, vector<16x8xf32> -> vector<16x8xf32>
    %12 = vector.extract_strided_slice %1 {offsets = [1, 0, 0], sizes = [1, 4, 8], strides = [1, 1, 1]} : vector<3x4x8xbf16> to vector<1x4x8xbf16>
    %13 = vector.shape_cast %12 : vector<1x4x8xbf16> to vector<4x8xbf16>
    %14 = vector.shape_cast %0 : vector<1x16x4xf32> to vector<16x4xf32>
    %15 = arith.truncf %14 : vector<16x4xf32> to vector<16x4xbf16>
    %cst_6 = arith.constant dense<0.000000e+00> : vector<16x8xf32>
    %16 = tpu.matmul %15, %13, %cst_6 {dimension_numbers = #tpu.dot_dimension_numbers<[1], [0], [0], [1], [0, 0, 1, 1], [], []>} : vector<16x4xbf16>, vector<4x8xbf16>, vector<16x8xf32> -> vector<16x8xf32>
    %17 = arith.addf %11, %16 : vector<16x8xf32>
    %18 = vector.extract_strided_slice %1 {offsets = [2, 0, 0], sizes = [1, 4, 8], strides = [1, 1, 1]} : vector<3x4x8xbf16> to vector<1x4x8xbf16>
    %19 = vector.shape_cast %18 : vector<1x4x8xbf16> to vector<4x8xbf16>
    %20 = vector.shape_cast %6 : vector<1x16x4xf32> to vector<16x4xf32>
    %21 = arith.truncf %20 : vector<16x4xf32> to vector<16x4xbf16>
    %cst_7 = arith.constant dense<0.000000e+00> : vector<16x8xf32>
    %22 = tpu.matmul %21, %19, %cst_7 {dimension_numbers = #tpu.dot_dimension_numbers<[1], [0], [0], [1], [0, 0, 1, 1], [], []>} : vector<16x4xbf16>, vector<4x8xbf16>, vector<16x8xf32> -> vector<16x8xf32>
    %23 = arith.addf %17, %22 : vector<16x8xf32>
    %24 = vector.shape_cast %23 : vector<16x8xf32> to vector<1x16x8xf32>
    %c0_8 = arith.constant 0 : index
    %c0_9 = arith.constant 0 : index
    %c0_10 = arith.constant 0 : index
    %25 = vector.load %arg3[%c0_8, %c0_9, %c0_10] : memref<1x16x8xf32, #tpu.memory_space<vmem>>, vector<1x16x8xf32>
    tpu.vector_store %arg3[%c0_8, %c0_9, %c0_10], %24 {strides = array<i32>} : memref<1x16x8xf32, #tpu.memory_space<vmem>>, vector<1x16x8xf32>,
    %cst_11 = arith.constant dense<0.000000e+00> : vector<8xf32>
    %26 = vector.multi_reduction <add>, %24, %cst_11 [0, 1] : vector<1x16x8xf32> to vector<8xf32>
    %27 = vector.shape_cast %26 : vector<8xf32> to vector<1x1x8xf32>
    %cst_12 = arith.constant 6.250000e-02 : f32
    %28 = vector.broadcast %cst_12 : f32 to vector<1x1x8xf32>
    %29 = arith.mulf %27, %28 : vector<1x1x8xf32>
    %30 = vector.broadcast %29 : vector<1x1x8xf32> to vector<1x16x8xf32>
    %31 = arith.subf %24, %30 : vector<1x16x8xf32>
    %32 = arith.mulf %31, %31 : vector<1x16x8xf32>
    %cst_13 = arith.constant dense<0.000000e+00> : vector<8xf32>
    %33 = vector.multi_reduction <add>, %32, %cst_13 [0, 1] : vector<1x16x8xf32> to vector<8xf32>
    %34 = vector.shape_cast %33 : vector<8xf32> to vector<1x1x8xf32>
    %35 = tpu.concatenate %29, %34 in 1 : vector<1x1x8xf32>, vector<1x1x8xf32> -> vector<1x2x8xf32>
    %c0_14 = arith.constant 0 : index
    %c0_15 = arith.constant 0 : index
    %c0_16 = arith.constant 0 : index
    %36 = vector.load %arg4[%c0_14, %c0_15, %c0_16] : memref<1x2x8xf32, #tpu.memory_space<vmem>>, vector<1x2x8xf32>
    tpu.vector_store %arg4[%c0_14, %c0_15, %c0_16], %35 {strides = array<i32>} : memref<1x2x8xf32, #tpu.memory_space<vmem>>, vector<1x2x8xf32>,
    return
  }
  func.func @transform_0(%arg0: i32) -> (i32, i32, i32) {
    %c0_i32 = arith.constant 0 : i32
    %c0_i32_0 = arith.constant 0 : i32
    %c0_i32_1 = arith.constant 0 : i32
    return %arg0, %c0_i32, %c0_i32_0 : i32, i32, i32
  }
  func.func @transform_1(%arg0: i32) -> (i32, i32, i32) {
    %c0_i32 = arith.constant 0 : i32
    %c0_i32_0 = arith.constant 0 : i32
    %c0_i32_1 = arith.constant 0 : i32
    %c0_i32_2 = arith.constant 0 : i32
    return %c0_i32, %c0_i32_0, %c0_i32_1 : i32, i32, i32
  }
  func.func @transform_2(%arg0: i32) -> (i32, i32, i32) {
    %c0_i32 = arith.constant 0 : i32
    %c0_i32_0 = arith.constant 0 : i32
    %c0_i32_1 = arith.constant 0 : i32
    return %arg0, %c0_i32, %c0_i32_0 : i32, i32, i32
  }
  func.func @transform_3(%arg0: i32) -> (i32, i32, i32) {
    %c0_i32 = arith.constant 0 : i32
    %c0_i32_0 = arith.constant 0 : i32
    %c0_i32_1 = arith.constant 0 : i32
    return %arg0, %c0_i32, %c0_i32_0 : i32, i32, i32
  }
}

module attributes {stable_mosaic.version = 11 : i64} {
  func.func @_bn_conv2_kernel(%arg0: i32, %arg1: memref<1x16x8xf32, #tpu.memory_space<vmem>>, %arg2: memref<2x2x8xf32, #tpu.memory_space<vmem>>, %arg3: memref<1x1x8xf32, #tpu.memory_space<vmem>>, %arg4: memref<1x1x8xf32, #tpu.memory_space<vmem>>, %arg5: memref<3x8x4xbf16, #tpu.memory_space<vmem>>, %arg6: memref<1x1x4xf32, #tpu.memory_space<vmem>>, %arg7: memref<1x16x4xf32, #tpu.memory_space<vmem>>) attributes {dimension_semantics = [#tpu.dimension_semantics<parallel>], iteration_bounds = array<i64: 2>, scalar_prefetch = 0 : i64, scratch_operands = 0 : i64, tpu.core_type = #tpu.core_type<tc>, window_params = [{transform_indices = @transform_0, window_bounds = array<i64: 1, 16, 8>}, {pipeline_mode = #tpu.pipeline_mode<synchronous>, transform_indices = @transform_1, window_bounds = array<i64: 2, 2, 8>}, {pipeline_mode = #tpu.pipeline_mode<synchronous>, transform_indices = @transform_2, window_bounds = array<i64: 1, 1, 8>}, {pipeline_mode = #tpu.pipeline_mode<synchronous>, transform_indices = @transform_3, window_bounds = array<i64: 1, 1, 8>}, {pipeline_mode = #tpu.pipeline_mode<synchronous>, transform_indices = @transform_4, window_bounds = array<i64: 3, 8, 4>}, {pipeline_mode = #tpu.pipeline_mode<synchronous>, transform_indices = @transform_5, window_bounds = array<i64: 1, 1, 4>}, {transform_indices = @transform_6, window_bounds = array<i64: 1, 16, 4>}]} {
    %c0 = arith.constant 0 : index
    %c0_0 = arith.constant 0 : index
    %c0_1 = arith.constant 0 : index
    %0 = vector.load %arg1[%c0, %c0_0, %c0_1] : memref<1x16x8xf32, #tpu.memory_space<vmem>>, vector<1x16x8xf32>
    %c0_2 = arith.constant 0 : index
    %c0_3 = arith.constant 0 : index
    %c0_4 = arith.constant 0 : index
    %1 = vector.load %arg2[%c0_2, %c0_3, %c0_4] : memref<2x2x8xf32, #tpu.memory_space<vmem>>, vector<2x2x8xf32>
    %c0_5 = arith.constant 0 : index
    %c0_6 = arith.constant 0 : index
    %c0_7 = arith.constant 0 : index
    %2 = vector.load %arg3[%c0_5, %c0_6, %c0_7] : memref<1x1x8xf32, #tpu.memory_space<vmem>>, vector<1x1x8xf32>
    %c0_8 = arith.constant 0 : index
    %c0_9 = arith.constant 0 : index
    %c0_10 = arith.constant 0 : index
    %3 = vector.load %arg4[%c0_8, %c0_9, %c0_10] : memref<1x1x8xf32, #tpu.memory_space<vmem>>, vector<1x1x8xf32>
    %c0_11 = arith.constant 0 : index
    %c0_12 = arith.constant 0 : index
    %c0_13 = arith.constant 0 : index
    %4 = vector.load %arg5[%c0_11, %c0_12, %c0_13] : memref<3x8x4xbf16, #tpu.memory_space<vmem>>, vector<3x8x4xbf16>
    %c0_14 = arith.constant 0 : index
    %c0_15 = arith.constant 0 : index
    %c0_16 = arith.constant 0 : index
    %5 = vector.load %arg6[%c0_14, %c0_15, %c0_16] : memref<1x1x4xf32, #tpu.memory_space<vmem>>, vector<1x1x4xf32>
    %6 = vector.extract_strided_slice %1 {offsets = [0, 0, 0], sizes = [2, 1, 8], strides = [1, 1, 1]} : vector<2x2x8xf32> to vector<2x1x8xf32>
    %7 = vector.extract_strided_slice %1 {offsets = [0, 1, 0], sizes = [2, 1, 8], strides = [1, 1, 1]} : vector<2x2x8xf32> to vector<2x1x8xf32>
    %cst = arith.constant dense<0.000000e+00> : vector<1x8xf32>
    %8 = vector.multi_reduction <add>, %6, %cst [0] : vector<2x1x8xf32> to vector<1x8xf32>
    %9 = vector.shape_cast %8 : vector<1x8xf32> to vector<1x1x8xf32>
    %cst_17 = arith.constant 5.000000e-01 : f32
    %10 = vector.broadcast %cst_17 : f32 to vector<1x1x8xf32>
    %11 = arith.mulf %9, %10 : vector<1x1x8xf32>
    %12 = vector.broadcast %11 : vector<1x1x8xf32> to vector<2x1x8xf32>
    %13 = arith.subf %6, %12 : vector<2x1x8xf32>
    %cst_18 = arith.constant dense<0.000000e+00> : vector<1x8xf32>
    %14 = vector.multi_reduction <add>, %7, %cst_18 [0] : vector<2x1x8xf32> to vector<1x8xf32>
    %15 = vector.shape_cast %14 : vector<1x8xf32> to vector<1x1x8xf32>
    %16 = arith.mulf %13, %13 : vector<2x1x8xf32>
    %cst_19 = arith.constant dense<0.000000e+00> : vector<1x8xf32>
    %17 = vector.multi_reduction <add>, %16, %cst_19 [0] : vector<2x1x8xf32> to vector<1x8xf32>
    %18 = vector.shape_cast %17 : vector<1x8xf32> to vector<1x1x8xf32>
    %cst_20 = arith.constant 1.600000e+01 : f32
    %19 = vector.broadcast %cst_20 : f32 to vector<1x1x8xf32>
    %20 = arith.mulf %19, %18 : vector<1x1x8xf32>
    %21 = arith.addf %15, %20 : vector<1x1x8xf32>
    %cst_21 = arith.constant 3.125000e-02 : f32
    %22 = vector.broadcast %cst_21 : f32 to vector<1x1x8xf32>
    %23 = arith.mulf %21, %22 : vector<1x1x8xf32>
    %cst_22 = arith.constant 9.99999974E-6 : f32
    %24 = vector.broadcast %cst_22 : f32 to vector<1x1x8xf32>
    %25 = arith.addf %23, %24 : vector<1x1x8xf32>
    %26 = math.rsqrt %25 : vector<1x1x8xf32>
    %27 = arith.mulf %2, %26 : vector<1x1x8xf32>
    %28 = arith.mulf %11, %27 : vector<1x1x8xf32>
    %29 = arith.subf %3, %28 : vector<1x1x8xf32>
    %30 = vector.broadcast %27 : vector<1x1x8xf32> to vector<1x16x8xf32>
    %31 = arith.mulf %0, %30 : vector<1x16x8xf32>
    %32 = vector.broadcast %29 : vector<1x1x8xf32> to vector<1x16x8xf32>
    %33 = arith.addf %31, %32 : vector<1x16x8xf32>
    %cst_23 = arith.constant 0.000000e+00 : f32
    %34 = vector.broadcast %cst_23 : f32 to vector<1x16x8xf32>
    %35 = arith.cmpf ogt, %33, %34 : vector<1x16x8xf32>
    %cst_24 = arith.constant 0.00999999977 : f32
    %36 = vector.broadcast %cst_24 : f32 to vector<1x16x8xf32>
    %37 = arith.mulf %36, %33 : vector<1x16x8xf32>
    %38 = arith.select %35, %33, %37 : vector<1x16x8xi1>, vector<1x16x8xf32>
    %cst_25 = arith.constant 0.000000e+00 : f32
    %39 = vector.broadcast %cst_25 : f32 to vector<1x1x8xf32>
    %40 = vector.extract_strided_slice %38 {offsets = [0, 0, 0], sizes = [1, 15, 8], strides = [1, 1, 1]} : vector<1x16x8xf32> to vector<1x15x8xf32>
    %41 = tpu.concatenate %39, %40 in 1 : vector<1x1x8xf32>, vector<1x15x8xf32> -> vector<1x16x8xf32>
    %42 = vector.extract_strided_slice %38 {offsets = [0, 1, 0], sizes = [1, 15, 8], strides = [1, 1, 1]} : vector<1x16x8xf32> to vector<1x15x8xf32>
    %43 = tpu.concatenate %42, %39 in 1 : vector<1x15x8xf32>, vector<1x1x8xf32> -> vector<1x16x8xf32>
    %44 = vector.extract_strided_slice %4 {offsets = [0, 0, 0], sizes = [1, 8, 4], strides = [1, 1, 1]} : vector<3x8x4xbf16> to vector<1x8x4xbf16>
    %45 = vector.shape_cast %44 : vector<1x8x4xbf16> to vector<8x4xbf16>
    %46 = vector.shape_cast %41 : vector<1x16x8xf32> to vector<16x8xf32>
    %47 = arith.truncf %46 : vector<16x8xf32> to vector<16x8xbf16>
    %cst_26 = arith.constant dense<0.000000e+00> : vector<16x4xf32>
    %48 = tpu.matmul %47, %45, %cst_26 {dimension_numbers = #tpu.dot_dimension_numbers<[1], [0], [0], [1], [0, 0, 1, 1], [], []>} : vector<16x8xbf16>, vector<8x4xbf16>, vector<16x4xf32> -> vector<16x4xf32>
    %49 = vector.extract_strided_slice %4 {offsets = [1, 0, 0], sizes = [1, 8, 4], strides = [1, 1, 1]} : vector<3x8x4xbf16> to vector<1x8x4xbf16>
    %50 = vector.shape_cast %49 : vector<1x8x4xbf16> to vector<8x4xbf16>
    %51 = vector.shape_cast %38 : vector<1x16x8xf32> to vector<16x8xf32>
    %52 = arith.truncf %51 : vector<16x8xf32> to vector<16x8xbf16>
    %cst_27 = arith.constant dense<0.000000e+00> : vector<16x4xf32>
    %53 = tpu.matmul %52, %50, %cst_27 {dimension_numbers = #tpu.dot_dimension_numbers<[1], [0], [0], [1], [0, 0, 1, 1], [], []>} : vector<16x8xbf16>, vector<8x4xbf16>, vector<16x4xf32> -> vector<16x4xf32>
    %54 = arith.addf %48, %53 : vector<16x4xf32>
    %55 = vector.extract_strided_slice %4 {offsets = [2, 0, 0], sizes = [1, 8, 4], strides = [1, 1, 1]} : vector<3x8x4xbf16> to vector<1x8x4xbf16>
    %56 = vector.shape_cast %55 : vector<1x8x4xbf16> to vector<8x4xbf16>
    %57 = vector.shape_cast %43 : vector<1x16x8xf32> to vector<16x8xf32>
    %58 = arith.truncf %57 : vector<16x8xf32> to vector<16x8xbf16>
    %cst_28 = arith.constant dense<0.000000e+00> : vector<16x4xf32>
    %59 = tpu.matmul %58, %56, %cst_28 {dimension_numbers = #tpu.dot_dimension_numbers<[1], [0], [0], [1], [0, 0, 1, 1], [], []>} : vector<16x8xbf16>, vector<8x4xbf16>, vector<16x4xf32> -> vector<16x4xf32>
    %60 = arith.addf %54, %59 : vector<16x4xf32>
    %61 = vector.shape_cast %60 : vector<16x4xf32> to vector<1x16x4xf32>
    %62 = vector.broadcast %5 : vector<1x1x4xf32> to vector<1x16x4xf32>
    %63 = arith.addf %61, %62 : vector<1x16x4xf32>
    %c0_29 = arith.constant 0 : index
    %c0_30 = arith.constant 0 : index
    %c0_31 = arith.constant 0 : index
    %64 = vector.load %arg7[%c0_29, %c0_30, %c0_31] : memref<1x16x4xf32, #tpu.memory_space<vmem>>, vector<1x16x4xf32>
    tpu.vector_store %arg7[%c0_29, %c0_30, %c0_31], %63 {strides = array<i32>} : memref<1x16x4xf32, #tpu.memory_space<vmem>>, vector<1x16x4xf32>,
    return
  }
  func.func @transform_0(%arg0: i32) -> (i32, i32, i32) {
    %c0_i32 = arith.constant 0 : i32
    %c0_i32_0 = arith.constant 0 : i32
    %c0_i32_1 = arith.constant 0 : i32
    return %arg0, %c0_i32, %c0_i32_0 : i32, i32, i32
  }
  func.func @transform_1(%arg0: i32) -> (i32, i32, i32) {
    %c0_i32 = arith.constant 0 : i32
    %c0_i32_0 = arith.constant 0 : i32
    %c0_i32_1 = arith.constant 0 : i32
    %c0_i32_2 = arith.constant 0 : i32
    return %c0_i32, %c0_i32_0, %c0_i32_1 : i32, i32, i32
  }
  func.func @transform_2(%arg0: i32) -> (i32, i32, i32) {
    %c0_i32 = arith.constant 0 : i32
    %c0_i32_0 = arith.constant 0 : i32
    %c0_i32_1 = arith.constant 0 : i32
    %c0_i32_2 = arith.constant 0 : i32
    return %c0_i32, %c0_i32_0, %c0_i32_1 : i32, i32, i32
  }
  func.func @transform_3(%arg0: i32) -> (i32, i32, i32) {
    %c0_i32 = arith.constant 0 : i32
    %c0_i32_0 = arith.constant 0 : i32
    %c0_i32_1 = arith.constant 0 : i32
    %c0_i32_2 = arith.constant 0 : i32
    return %c0_i32, %c0_i32_0, %c0_i32_1 : i32, i32, i32
  }
  func.func @transform_4(%arg0: i32) -> (i32, i32, i32) {
    %c0_i32 = arith.constant 0 : i32
    %c0_i32_0 = arith.constant 0 : i32
    %c0_i32_1 = arith.constant 0 : i32
    %c0_i32_2 = arith.constant 0 : i32
    return %c0_i32, %c0_i32_0, %c0_i32_1 : i32, i32, i32
  }
  func.func @transform_5(%arg0: i32) -> (i32, i32, i32) {
    %c0_i32 = arith.constant 0 : i32
    %c0_i32_0 = arith.constant 0 : i32
    %c0_i32_1 = arith.constant 0 : i32
    %c0_i32_2 = arith.constant 0 : i32
    return %c0_i32, %c0_i32_0, %c0_i32_1 : i32, i32, i32
  }
  func.func @transform_6(%arg0: i32) -> (i32, i32, i32) {
    %c0_i32 = arith.constant 0 : i32
    %c0_i32_0 = arith.constant 0 : i32
    %c0_i32_1 = arith.constant 0 : i32
    return %arg0, %c0_i32, %c0_i32_0 : i32, i32, i32
  }
}

module attributes {stable_mosaic.version = 11 : i64} {
  func.func @_bn_conv2_residual_kernel(%arg0: i32, %arg1: memref<1x16x8xf32, #tpu.memory_space<vmem>>, %arg2: memref<2x2x8xf32, #tpu.memory_space<vmem>>, %arg3: memref<1x16x4xf32, #tpu.memory_space<vmem>>, %arg4: memref<1x16x4xf32, #tpu.memory_space<vmem>>, %arg5: memref<1x1x8xf32, #tpu.memory_space<vmem>>, %arg6: memref<1x1x8xf32, #tpu.memory_space<vmem>>, %arg7: memref<3x8x4xbf16, #tpu.memory_space<vmem>>, %arg8: memref<1x1x4xf32, #tpu.memory_space<vmem>>, %arg9: memref<1x16x4xf32, #tpu.memory_space<vmem>>) attributes {dimension_semantics = [#tpu.dimension_semantics<parallel>], iteration_bounds = array<i64: 2>, scalar_prefetch = 0 : i64, scratch_operands = 0 : i64, tpu.core_type = #tpu.core_type<tc>, window_params = [{transform_indices = @transform_0, window_bounds = array<i64: 1, 16, 8>}, {pipeline_mode = #tpu.pipeline_mode<synchronous>, transform_indices = @transform_1, window_bounds = array<i64: 2, 2, 8>}, {transform_indices = @transform_2, window_bounds = array<i64: 1, 16, 4>}, {transform_indices = @transform_3, window_bounds = array<i64: 1, 16, 4>}, {pipeline_mode = #tpu.pipeline_mode<synchronous>, transform_indices = @transform_4, window_bounds = array<i64: 1, 1, 8>}, {pipeline_mode = #tpu.pipeline_mode<synchronous>, transform_indices = @transform_5, window_bounds = array<i64: 1, 1, 8>}, {pipeline_mode = #tpu.pipeline_mode<synchronous>, transform_indices = @transform_6, window_bounds = array<i64: 3, 8, 4>}, {pipeline_mode = #tpu.pipeline_mode<synchronous>, transform_indices = @transform_7, window_bounds = array<i64: 1, 1, 4>}, {transform_indices = @transform_8, window_bounds = array<i64: 1, 16, 4>}]} {
    %c0 = arith.constant 0 : index
    %c0_0 = arith.constant 0 : index
    %c0_1 = arith.constant 0 : index
    %0 = vector.load %arg1[%c0, %c0_0, %c0_1] : memref<1x16x8xf32, #tpu.memory_space<vmem>>, vector<1x16x8xf32>
    %c0_2 = arith.constant 0 : index
    %c0_3 = arith.constant 0 : index
    %c0_4 = arith.constant 0 : index
    %1 = vector.load %arg2[%c0_2, %c0_3, %c0_4] : memref<2x2x8xf32, #tpu.memory_space<vmem>>, vector<2x2x8xf32>
    %c0_5 = arith.constant 0 : index
    %c0_6 = arith.constant 0 : index
    %c0_7 = arith.constant 0 : index
    %2 = vector.load %arg5[%c0_5, %c0_6, %c0_7] : memref<1x1x8xf32, #tpu.memory_space<vmem>>, vector<1x1x8xf32>
    %c0_8 = arith.constant 0 : index
    %c0_9 = arith.constant 0 : index
    %c0_10 = arith.constant 0 : index
    %3 = vector.load %arg6[%c0_8, %c0_9, %c0_10] : memref<1x1x8xf32, #tpu.memory_space<vmem>>, vector<1x1x8xf32>
    %c0_11 = arith.constant 0 : index
    %c0_12 = arith.constant 0 : index
    %c0_13 = arith.constant 0 : index
    %4 = vector.load %arg7[%c0_11, %c0_12, %c0_13] : memref<3x8x4xbf16, #tpu.memory_space<vmem>>, vector<3x8x4xbf16>
    %c0_14 = arith.constant 0 : index
    %c0_15 = arith.constant 0 : index
    %c0_16 = arith.constant 0 : index
    %5 = vector.load %arg8[%c0_14, %c0_15, %c0_16] : memref<1x1x4xf32, #tpu.memory_space<vmem>>, vector<1x1x4xf32>
    %6 = vector.extract_strided_slice %1 {offsets = [0, 0, 0], sizes = [2, 1, 8], strides = [1, 1, 1]} : vector<2x2x8xf32> to vector<2x1x8xf32>
    %7 = vector.extract_strided_slice %1 {offsets = [0, 1, 0], sizes = [2, 1, 8], strides = [1, 1, 1]} : vector<2x2x8xf32> to vector<2x1x8xf32>
    %cst = arith.constant dense<0.000000e+00> : vector<1x8xf32>
    %8 = vector.multi_reduction <add>, %6, %cst [0] : vector<2x1x8xf32> to vector<1x8xf32>
    %9 = vector.shape_cast %8 : vector<1x8xf32> to vector<1x1x8xf32>
    %cst_17 = arith.constant 5.000000e-01 : f32
    %10 = vector.broadcast %cst_17 : f32 to vector<1x1x8xf32>
    %11 = arith.mulf %9, %10 : vector<1x1x8xf32>
    %12 = vector.broadcast %11 : vector<1x1x8xf32> to vector<2x1x8xf32>
    %13 = arith.subf %6, %12 : vector<2x1x8xf32>
    %cst_18 = arith.constant dense<0.000000e+00> : vector<1x8xf32>
    %14 = vector.multi_reduction <add>, %7, %cst_18 [0] : vector<2x1x8xf32> to vector<1x8xf32>
    %15 = vector.shape_cast %14 : vector<1x8xf32> to vector<1x1x8xf32>
    %16 = arith.mulf %13, %13 : vector<2x1x8xf32>
    %cst_19 = arith.constant dense<0.000000e+00> : vector<1x8xf32>
    %17 = vector.multi_reduction <add>, %16, %cst_19 [0] : vector<2x1x8xf32> to vector<1x8xf32>
    %18 = vector.shape_cast %17 : vector<1x8xf32> to vector<1x1x8xf32>
    %cst_20 = arith.constant 1.600000e+01 : f32
    %19 = vector.broadcast %cst_20 : f32 to vector<1x1x8xf32>
    %20 = arith.mulf %19, %18 : vector<1x1x8xf32>
    %21 = arith.addf %15, %20 : vector<1x1x8xf32>
    %cst_21 = arith.constant 3.125000e-02 : f32
    %22 = vector.broadcast %cst_21 : f32 to vector<1x1x8xf32>
    %23 = arith.mulf %21, %22 : vector<1x1x8xf32>
    %cst_22 = arith.constant 9.99999974E-6 : f32
    %24 = vector.broadcast %cst_22 : f32 to vector<1x1x8xf32>
    %25 = arith.addf %23, %24 : vector<1x1x8xf32>
    %26 = math.rsqrt %25 : vector<1x1x8xf32>
    %27 = arith.mulf %2, %26 : vector<1x1x8xf32>
    %28 = arith.mulf %11, %27 : vector<1x1x8xf32>
    %29 = arith.subf %3, %28 : vector<1x1x8xf32>
    %30 = vector.broadcast %27 : vector<1x1x8xf32> to vector<1x16x8xf32>
    %31 = arith.mulf %0, %30 : vector<1x16x8xf32>
    %32 = vector.broadcast %29 : vector<1x1x8xf32> to vector<1x16x8xf32>
    %33 = arith.addf %31, %32 : vector<1x16x8xf32>
    %cst_23 = arith.constant 0.000000e+00 : f32
    %34 = vector.broadcast %cst_23 : f32 to vector<1x16x8xf32>
    %35 = arith.cmpf ogt, %33, %34 : vector<1x16x8xf32>
    %cst_24 = arith.constant 0.00999999977 : f32
    %36 = vector.broadcast %cst_24 : f32 to vector<1x16x8xf32>
    %37 = arith.mulf %36, %33 : vector<1x16x8xf32>
    %38 = arith.select %35, %33, %37 : vector<1x16x8xi1>, vector<1x16x8xf32>
    %cst_25 = arith.constant 0.000000e+00 : f32
    %39 = vector.broadcast %cst_25 : f32 to vector<1x1x8xf32>
    %40 = vector.extract_strided_slice %38 {offsets = [0, 0, 0], sizes = [1, 15, 8], strides = [1, 1, 1]} : vector<1x16x8xf32> to vector<1x15x8xf32>
    %41 = tpu.concatenate %39, %40 in 1 : vector<1x1x8xf32>, vector<1x15x8xf32> -> vector<1x16x8xf32>
    %42 = vector.extract_strided_slice %38 {offsets = [0, 1, 0], sizes = [1, 15, 8], strides = [1, 1, 1]} : vector<1x16x8xf32> to vector<1x15x8xf32>
    %43 = tpu.concatenate %42, %39 in 1 : vector<1x15x8xf32>, vector<1x1x8xf32> -> vector<1x16x8xf32>
    %44 = vector.extract_strided_slice %4 {offsets = [0, 0, 0], sizes = [1, 8, 4], strides = [1, 1, 1]} : vector<3x8x4xbf16> to vector<1x8x4xbf16>
    %45 = vector.shape_cast %44 : vector<1x8x4xbf16> to vector<8x4xbf16>
    %46 = vector.shape_cast %41 : vector<1x16x8xf32> to vector<16x8xf32>
    %47 = arith.truncf %46 : vector<16x8xf32> to vector<16x8xbf16>
    %cst_26 = arith.constant dense<0.000000e+00> : vector<16x4xf32>
    %48 = tpu.matmul %47, %45, %cst_26 {dimension_numbers = #tpu.dot_dimension_numbers<[1], [0], [0], [1], [0, 0, 1, 1], [], []>} : vector<16x8xbf16>, vector<8x4xbf16>, vector<16x4xf32> -> vector<16x4xf32>
    %49 = vector.extract_strided_slice %4 {offsets = [1, 0, 0], sizes = [1, 8, 4], strides = [1, 1, 1]} : vector<3x8x4xbf16> to vector<1x8x4xbf16>
    %50 = vector.shape_cast %49 : vector<1x8x4xbf16> to vector<8x4xbf16>
    %51 = vector.shape_cast %38 : vector<1x16x8xf32> to vector<16x8xf32>
    %52 = arith.truncf %51 : vector<16x8xf32> to vector<16x8xbf16>
    %cst_27 = arith.constant dense<0.000000e+00> : vector<16x4xf32>
    %53 = tpu.matmul %52, %50, %cst_27 {dimension_numbers = #tpu.dot_dimension_numbers<[1], [0], [0], [1], [0, 0, 1, 1], [], []>} : vector<16x8xbf16>, vector<8x4xbf16>, vector<16x4xf32> -> vector<16x4xf32>
    %54 = arith.addf %48, %53 : vector<16x4xf32>
    %55 = vector.extract_strided_slice %4 {offsets = [2, 0, 0], sizes = [1, 8, 4], strides = [1, 1, 1]} : vector<3x8x4xbf16> to vector<1x8x4xbf16>
    %56 = vector.shape_cast %55 : vector<1x8x4xbf16> to vector<8x4xbf16>
    %57 = vector.shape_cast %43 : vector<1x16x8xf32> to vector<16x8xf32>
    %58 = arith.truncf %57 : vector<16x8xf32> to vector<16x8xbf16>
    %cst_28 = arith.constant dense<0.000000e+00> : vector<16x4xf32>
    %59 = tpu.matmul %58, %56, %cst_28 {dimension_numbers = #tpu.dot_dimension_numbers<[1], [0], [0], [1], [0, 0, 1, 1], [], []>} : vector<16x8xbf16>, vector<8x4xbf16>, vector<16x4xf32> -> vector<16x4xf32>
    %60 = arith.addf %54, %59 : vector<16x4xf32>
    %61 = vector.shape_cast %60 : vector<16x4xf32> to vector<1x16x4xf32>
    %62 = vector.broadcast %5 : vector<1x1x4xf32> to vector<1x16x4xf32>
    %63 = arith.addf %61, %62 : vector<1x16x4xf32>
    %c0_29 = arith.constant 0 : index
    %c0_30 = arith.constant 0 : index
    %c0_31 = arith.constant 0 : index
    %64 = vector.load %arg4[%c0_29, %c0_30, %c0_31] : memref<1x16x4xf32, #tpu.memory_space<vmem>>, vector<1x16x4xf32>
    %c0_32 = arith.constant 0 : index
    %c0_33 = arith.constant 0 : index
    %c0_34 = arith.constant 0 : index
    %65 = vector.load %arg3[%c0_32, %c0_33, %c0_34] : memref<1x16x4xf32, #tpu.memory_space<vmem>>, vector<1x16x4xf32>
    %66 = arith.addf %64, %65 : vector<1x16x4xf32>
    %67 = arith.addf %66, %63 : vector<1x16x4xf32>
    %c0_35 = arith.constant 0 : index
    %c0_36 = arith.constant 0 : index
    %c0_37 = arith.constant 0 : index
    %68 = vector.load %arg9[%c0_35, %c0_36, %c0_37] : memref<1x16x4xf32, #tpu.memory_space<vmem>>, vector<1x16x4xf32>
    tpu.vector_store %arg9[%c0_35, %c0_36, %c0_37], %67 {strides = array<i32>} : memref<1x16x4xf32, #tpu.memory_space<vmem>>, vector<1x16x4xf32>,
    return
  }
  func.func @transform_0(%arg0: i32) -> (i32, i32, i32) {
    %c0_i32 = arith.constant 0 : i32
    %c0_i32_0 = arith.constant 0 : i32
    %c0_i32_1 = arith.constant 0 : i32
    return %arg0, %c0_i32, %c0_i32_0 : i32, i32, i32
  }
  func.func @transform_1(%arg0: i32) -> (i32, i32, i32) {
    %c0_i32 = arith.constant 0 : i32
    %c0_i32_0 = arith.constant 0 : i32
    %c0_i32_1 = arith.constant 0 : i32
    %c0_i32_2 = arith.constant 0 : i32
    return %c0_i32, %c0_i32_0, %c0_i32_1 : i32, i32, i32
  }
  func.func @transform_2(%arg0: i32) -> (i32, i32, i32) {
    %c0_i32 = arith.constant 0 : i32
    %c0_i32_0 = arith.constant 0 : i32
    %c0_i32_1 = arith.constant 0 : i32
    return %arg0, %c0_i32, %c0_i32_0 : i32, i32, i32
  }
  func.func @transform_3(%arg0: i32) -> (i32, i32, i32) {
    %c0_i32 = arith.constant 0 : i32
    %c0_i32_0 = arith.constant 0 : i32
    %c0_i32_1 = arith.constant 0 : i32
    return %arg0, %c0_i32, %c0_i32_0 : i32, i32, i32
  }
  func.func @transform_4(%arg0: i32) -> (i32, i32, i32) {
    %c0_i32 = arith.constant 0 : i32
    %c0_i32_0 = arith.constant 0 : i32
    %c0_i32_1 = arith.constant 0 : i32
    %c0_i32_2 = arith.constant 0 : i32
    return %c0_i32, %c0_i32_0, %c0_i32_1 : i32, i32, i32
  }
  func.func @transform_5(%arg0: i32) -> (i32, i32, i32) {
    %c0_i32 = arith.constant 0 : i32
    %c0_i32_0 = arith.constant 0 : i32
    %c0_i32_1 = arith.constant 0 : i32
    %c0_i32_2 = arith.constant 0 : i32
    return %c0_i32, %c0_i32_0, %c0_i32_1 : i32, i32, i32
  }
  func.func @transform_6(%arg0: i32) -> (i32, i32, i32) {
    %c0_i32 = arith.constant 0 : i32
    %c0_i32_0 = arith.constant 0 : i32
    %c0_i32_1 = arith.constant 0 : i32
    %c0_i32_2 = arith.constant 0 : i32
    return %c0_i32, %c0_i32_0, %c0_i32_1 : i32, i32, i32
  }
  func.func @transform_7(%arg0: i32) -> (i32, i32, i32) {
    %c0_i32 = arith.constant 0 : i32
    %c0_i32_0 = arith.constant 0 : i32
    %c0_i32_1 = arith.constant 0 : i32
    %c0_i32_2 = arith.constant 0 : i32
    return %c0_i32, %c0_i32_0, %c0_i32_1 : i32, i32, i32
  }
  func.func @transform_8(%arg0: i32) -> (i32, i32, i32) {
    %c0_i32 = arith.constant 0 : i32
    %c0_i32_0 = arith.constant 0 : i32
    %c0_i32_1 = arith.constant 0 : i32
    return %arg0, %c0_i32, %c0_i32_0 : i32, i32, i32
  }
}

</mosaic_0001>

<llo_original>
// kernel: dec_conv_block.7
$region0: #{dec_conv_block.7}
  #allocation0 [shape = 'u32[]', space=smem, size = 0x4, offset = 0x4, fixed_abs, tag = 'smem constant byte address 0x4 - core index']
  #allocation1 [shape = 'u32[144,128]{1,0:T(1,128)}', space=vmem, size = 0x12000, scoped, tag = 'internal scratch']
  %s0 = inlined_call_operand.vmem [shape: f32[2,16,8], index: 0, kind: input, shape index: {}]
  %s1 = inlined_call_operand.vmem [shape: f32[2,2,8], index: 1, kind: input, shape index: {}]
  %s2 = inlined_call_operand.vmem [shape: f32[2,16,4], index: 2, kind: input, shape index: {}]
  %s3 = inlined_call_operand.vmem [shape: f32[2,16,4], index: 3, kind: input, shape index: {}]
  %s4 = inlined_call_operand.vmem [shape: f32[1,1,8], index: 4, kind: input, shape index: {}]
  %s5 = inlined_call_operand.vmem [shape: f32[1,1,8], index: 5, kind: input, shape index: {}]
  %s6 = inlined_call_operand.vmem [shape: bf16[3,8,4], index: 6, kind: input, shape index: {}]
  %s7 = inlined_call_operand.vmem [shape: f32[1,1,4], index: 7, kind: input, shape index: {}]
  %s8 = inlined_call_operand.vmem [shape: f32[2,16,4], index: 8, kind: output, shape index: {}]
  %s9 = sld [smem:[#allocation0]]
  $region65: #{dec_conv_block.7} parent=0
    _
  %s11 = ssub.s32 1, %s9
  %s12 = scalar_select 0, %s11, %s9
  loop: start=0, step=1, limit=4
  $region2: #{dec_conv_block.7} parent=0 // loop_pre_header
    _
  $region3: #{dec_conv_block.7} parent=0 // loop_header
    %s14 = sphi 0, %s18
    %p15 = scmp.ge.s32.totalorder %s14, 4
    %s24 = sphi 0, %s26
    %s27 = sphi 0, %s24
    %s28 = sphi 0, %s27
    %s44 = sphi 0, %s28
    %s48 = sphi 0, %s48
    %s50 = sphi 0, %s48
    %s51 = sphi 0, %s50
    %s65 = sphi 0, %s51
    %s71 = sphi 0, %s73
    %s74 = sphi 0, %s71
    %s75 = sphi 0, %s74
    %s91 = sphi 0, %s75
    %s97 = sphi 0, %s99
    %s100 = sphi 0, %s97
    %s101 = sphi 0, %s100
    %s117 = sphi 0, %s101
    %s121 = sphi 0, %s121
    %s123 = sphi 0, %s121
    %s124 = sphi 0, %s123
    %s138 = sphi 0, %s124
    %s142 = sphi 0, %s142
    %s144 = sphi 0, %s142
    %s145 = sphi 0, %s144
    %s159 = sphi 0, %s145
    %s163 = sphi 0, %s163
    %s165 = sphi 0, %s163
    %s166 = sphi 0, %s165
    %s180 = sphi 0, %s166
    %s184 = sphi 0, %s184
    %s186 = sphi 0, %s184
    %s187 = sphi 0, %s186
    %s201 = sphi 0, %s187
    %s207 = sphi 0, %s209
    %s210 = sphi 0, %s207
    %s211 = sphi 0, %s210
    %s227 = sphi 0, %s211
  $region4: #{dec_conv_block.7} parent=0 // loop_header_branch
    %17 = sbr.rel (%p15) target = $region8
  $region5: #{dec_conv_block.7} parent=0 // loop_body
    %s19 = ssub.s32 %s14, 1
    %s20 = ssub.s32 %s14, 2
    %s21 = sadd.s32 %s14, 1
    %s22 = ssub.s32 %s14, %s21
    %p23 = scmp.eq.s32.totalorder %s22, 0
    %s25 = sadd.s32 %s24, 1
    %s26 = scalar_select %p23, %s24, %s25
    %p29 = pneg %p23
    %p30 = scmp.eq.s32.totalorder %s14, 1
    %p31 = por %p29, %p30
    %p32 = scmp.ne.s32.totalorder %s24, %s27
    %p33 = scmp.eq.s32.totalorder %s14, 0
    %p34 = por %p32, %p33
    %p35 = scmp.ne.s32.totalorder %s24, %s27
    %p36 = scmp.eq.s32.totalorder %s19, 1
    %p37 = por %p35, %p36
    %p38 = scmp.ne.s32.totalorder %s27, %s28
    %p39 = scmp.eq.s32.totalorder %s19, 0
    %p40 = por %p38, %p39
    %p41 = scmp.ne.s32.totalorder %s27, %s28
    %p42 = scmp.eq.s32.totalorder %s20, 1
    %p43 = por %p41, %p42
    %p45 = scmp.ne.s32.totalorder %s28, %s44
    %p46 = scmp.eq.s32.totalorder %s20, 0
    %p47 = por %p45, %p46
    %s49 = sadd.s32 %s48, 1
    %p52 = scmp.eq.s32.totalorder %s14, 1
    %p53 = scmp.ne.s32.totalorder %s48, %s50
    %p54 = scmp.eq.s32.totalorder %s14, 0
    %p55 = por %p53, %p54
    %p56 = scmp.ne.s32.totalorder %s48, %s50
    %p57 = scmp.eq.s32.totalorder %s19, 1
    %p58 = por %p56, %p57
    %p59 = scmp.ne.s32.totalorder %s50, %s51
    %p60 = scmp.eq.s32.totalorder %s19, 0
    %p61 = por %p59, %p60
    %p62 = scmp.ne.s32.totalorder %s50, %s51
    %p63 = scmp.eq.s32.totalorder %s20, 1
    %p64 = por %p62, %p63
    %p66 = scmp.ne.s32.totalorder %s51, %s65
    %p67 = scmp.eq.s32.totalorder %s20, 0
    %p68 = por %p66, %p67
    %s69 = ssub.s32 %s14, %s21
    %p70 = scmp.eq.s32.totalorder %s69, 0
    %s72 = sadd.s32 %s71, 1
    %s73 = scalar_select %p70, %s71, %s72
    %p76 = pneg %p70
    %p77 = scmp.eq.s32.totalorder %s14, 1
    %p78 = por %p76, %p77
    %p79 = scmp.ne.s32.totalorder %s71, %s74
    %p80 = scmp.eq.s32.totalorder %s14, 0
    %p81 = por %p79, %p80
    %p82 = scmp.ne.s32.totalorder %s71, %s74
    %p83 = scmp.eq.s32.totalorder %s19, 1
    %p84 = por %p82, %p83
    %p85 = scmp.ne.s32.totalorder %s74, %s75
    %p86 = scmp.eq.s32.totalorder %s19, 0
    %p87 = por %p85, %p86
    %p88 = scmp.ne.s32.totalorder %s74, %s75
    %p89 = scmp.eq.s32.totalorder %s20, 1
    %p90 = por %p88, %p89
    %p92 = scmp.ne.s32.totalorder %s75, %s91
    %p93 = scmp.eq.s32.totalorder %s20, 0
    %p94 = por %p92, %p93
    %s95 = ssub.s32 %s14, %s21
    %p96 = scmp.eq.s32.totalorder %s95, 0
    %s98 = sadd.s32 %s97, 1
    %s99 = scalar_select %p96, %s97, %s98
    %p102 = pneg %p96
    %p103 = scmp.eq.s32.totalorder %s14, 1
    %p104 = por %p102, %p103
    %p105 = scmp.ne.s32.totalorder %s97, %s100
    %p106 = scmp.eq.s32.totalorder %s14, 0
    %p107 = por %p105, %p106
    %p108 = scmp.ne.s32.totalorder %s97, %s100
    %p109 = scmp.eq.s32.totalorder %s19, 1
    %p110 = por %p108, %p109
    %p111 = scmp.ne.s32.totalorder %s100, %s101
    %p112 = scmp.eq.s32.totalorder %s19, 0
    %p113 = por %p111, %p112
    %p114 = scmp.ne.s32.totalorder %s100, %s101
    %p115 = scmp.eq.s32.totalorder %s20, 1
    %p116 = por %p114, %p115
    %p118 = scmp.ne.s32.totalorder %s101, %s117
    %p119 = scmp.eq.s32.totalorder %s20, 0
    %p120 = por %p118, %p119
    %s122 = sadd.s32 %s121, 1
    %p125 = scmp.eq.s32.totalorder %s14, 1
    %p126 = scmp.ne.s32.totalorder %s121, %s123
    %p127 = scmp.eq.s32.totalorder %s14, 0
    %p128 = por %p126, %p127
    %p129 = scmp.ne.s32.totalorder %s121, %s123
    %p130 = scmp.eq.s32.totalorder %s19, 1
    %p131 = por %p129, %p130
    %p132 = scmp.ne.s32.totalorder %s123, %s124
    %p133 = scmp.eq.s32.totalorder %s19, 0
    %p134 = por %p132, %p133
    %p135 = scmp.ne.s32.totalorder %s123, %s124
    %p136 = scmp.eq.s32.totalorder %s20, 1
    %p137 = por %p135, %p136
    %p139 = scmp.ne.s32.totalorder %s124, %s138
    %p140 = scmp.eq.s32.totalorder %s20, 0
    %p141 = por %p139, %p140
    %s143 = sadd.s32 %s142, 1
    %p146 = scmp.eq.s32.totalorder %s14, 1
    %p147 = scmp.ne.s32.totalorder %s142, %s144
    %p148 = scmp.eq.s32.totalorder %s14, 0
    %p149 = por %p147, %p148
    %p150 = scmp.ne.s32.totalorder %s142, %s144
    %p151 = scmp.eq.s32.totalorder %s19, 1
    %p152 = por %p150, %p151
    %p153 = scmp.ne.s32.totalorder %s144, %s145
    %p154 = scmp.eq.s32.totalorder %s19, 0
    %p155 = por %p153, %p154
    %p156 = scmp.ne.s32.totalorder %s144, %s145
    %p157 = scmp.eq.s32.totalorder %s20, 1
    %p158 = por %p156, %p157
    %p160 = scmp.ne.s32.totalorder %s145, %s159
    %p161 = scmp.eq.s32.totalorder %s20, 0
    %p162 = por %p160, %p161
    %s164 = sadd.s32 %s163, 1
    %p167 = scmp.eq.s32.totalorder %s14, 1
    %p168 = scmp.ne.s32.totalorder %s163, %s165
    %p169 = scmp.eq.s32.totalorder %s14, 0
    %p170 = por %p168, %p169
    %p171 = scmp.ne.s32.totalorder %s163, %s165
    %p172 = scmp.eq.s32.totalorder %s19, 1
    %p173 = por %p171, %p172
    %p174 = scmp.ne.s32.totalorder %s165, %s166
    %p175 = scmp.eq.s32.totalorder %s19, 0
    %p176 = por %p174, %p175
    %p177 = scmp.ne.s32.totalorder %s165, %s166
    %p178 = scmp.eq.s32.totalorder %s20, 1
    %p179 = por %p177, %p178
    %p181 = scmp.ne.s32.totalorder %s166, %s180
    %p182 = scmp.eq.s32.totalorder %s20, 0
    %p183 = por %p181, %p182
    %s185 = sadd.s32 %s184, 1
    %p188 = scmp.eq.s32.totalorder %s14, 1
    %p189 = scmp.ne.s32.totalorder %s184, %s186
    %p190 = scmp.eq.s32.totalorder %s14, 0
    %p191 = por %p189, %p190
    %p192 = scmp.ne.s32.totalorder %s184, %s186
    %p193 = scmp.eq.s32.totalorder %s19, 1
    %p194 = por %p192, %p193
    %p195 = scmp.ne.s32.totalorder %s186, %s187
    %p196 = scmp.eq.s32.totalorder %s19, 0
    %p197 = por %p195, %p196
    %p198 = scmp.ne.s32.totalorder %s186, %s187
    %p199 = scmp.eq.s32.totalorder %s20, 1
    %p200 = por %p198, %p199
    %p202 = scmp.ne.s32.totalorder %s187, %s201
    %p203 = scmp.eq.s32.totalorder %s20, 0
    %p204 = por %p202, %p203
    %s205 = ssub.s32 %s14, %s21
    %p206 = scmp.eq.s32.totalorder %s205, 0
    %s208 = sadd.s32 %s207, 1
    %s209 = scalar_select %p206, %s207, %s208
    %p212 = pneg %p206
    %p213 = scmp.eq.s32.totalorder %s14, 1
    %p214 = por %p212, %p213
    %p215 = scmp.ne.s32.totalorder %s207, %s210
    %p216 = scmp.eq.s32.totalorder %s14, 0
    %p217 = por %p215, %p216
    %p218 = scmp.ne.s32.totalorder %s207, %s210
    %p219 = scmp.eq.s32.totalorder %s19, 1
    %p220 = por %p218, %p219
    %p221 = scmp.ne.s32.totalorder %s210, %s211
    %p222 = scmp.eq.s32.totalorder %s19, 0
    %p223 = por %p221, %p222
    %p224 = scmp.ne.s32.totalorder %s210, %s211
    %p225 = scmp.eq.s32.totalorder %s20, 1
    %p226 = por %p224, %p225
    %p228 = scmp.ne.s32.totalorder %s211, %s227
    %p229 = scmp.eq.s32.totalorder %s20, 0
    %p230 = por %p228, %p229
    %p231 = scmp.le.s32.totalorder 1, %s14
    %p232 = scmp.lt.s32.totalorder %s14, 3
    %p233 = pnand %p231, %p232
    %p234 = pneg %p233
    // Predicated region
    $region9: #{dec_conv_block.7} parent=5 // pred_check
      _
    $region10: #{dec_conv_block.7} parent=5 // pred_check_branch
      %236 = sbr.rel (%p233) target = $region12
    $region11: #{dec_conv_block.7} parent=5 // pred_region
      %s237 = ssub.s32 %s14, 1
      // Predicated region
      $region13: #{dec_conv_block.7} parent=11 // pred_check
        %p238 = pneg %p61
      $region14: #{dec_conv_block.7} parent=11 // pred_check_branch
        %240 = sbr.rel (%p238) target = $region16
      $region15: #{dec_conv_block.7} parent=11 // pred_region
        _
      $region16: #{dec_conv_block.7} parent=11 // pred_fallthru
        _
      // Predicated region
      $region17: #{dec_conv_block.7} parent=11 // pred_check
        %p241 = pneg %p134
      $region18: #{dec_conv_block.7} parent=11 // pred_check_branch
        %243 = sbr.rel (%p241) target = $region20
      $region19: #{dec_conv_block.7} parent=11 // pred_region
        _
      $region20: #{dec_conv_block.7} parent=11 // pred_fallthru
        _
      // Predicated region
      $region21: #{dec_conv_block.7} parent=11 // pred_check
        %p244 = pneg %p155
      $region22: #{dec_conv_block.7} parent=11 // pred_check_branch
        %246 = sbr.rel (%p244) target = $region24
      $region23: #{dec_conv_block.7} parent=11 // pred_region
        _
      $region24: #{dec_conv_block.7} parent=11 // pred_fallthru
        _
      // Predicated region
      $region25: #{dec_conv_block.7} parent=11 // pred_check
        %p247 = pneg %p176
      $region26: #{dec_conv_block.7} parent=11 // pred_check_branch
        %249 = sbr.rel (%p247) target = $region28
      $region27: #{dec_conv_block.7} parent=11 // pred_region
        _
      $region28: #{dec_conv_block.7} parent=11 // pred_fallthru
        _
      // Predicated region
      $region29: #{dec_conv_block.7} parent=11 // pred_check
        %p250 = pneg %p197
      $region30: #{dec_conv_block.7} parent=11 // pred_check_branch
        %252 = sbr.rel (%p250) target = $region32
      $region31: #{dec_conv_block.7} parent=11 // pred_region
        _
      $region32: #{dec_conv_block.7} parent=11 // pred_fallthru
        _
    $region12: #{dec_conv_block.7} parent=5 // pred_fallthru
      _
    %p253 = scmp.lt.s32.totalorder %s14, 2
    // Predicated region
    $region33: #{dec_conv_block.7} parent=5 // pred_check
      %p254 = pneg %p253
    $region34: #{dec_conv_block.7} parent=5 // pred_check_branch
      %256 = sbr.rel (%p254) target = $region36
    $region35: #{dec_conv_block.7} parent=5 // pred_region
      // Predicated region
      $region37: #{dec_conv_block.7} parent=35 // pred_check
        %p257 = pneg %p34
      $region38: #{dec_conv_block.7} parent=35 // pred_check_branch
        %259 = sbr.rel (%p257) target = $region40
      $region39: #{dec_conv_block.7} parent=35 // pred_region
        %p260 = scmp.lt.s32.totalorder %s14, 1
        %s261 = scalar_select %p260, %s14, 1
        %s262 = smul.addr %s261, 2
        %s263 = smul.addr %s262, 8
        %s264 = scalar_lea.vmem %s0, %s263
      $region40: #{dec_conv_block.7} parent=35 // pred_fallthru
        _
      // Predicated region
      $region41: #{dec_conv_block.7} parent=35 // pred_check
        %p265 = pneg %p81
      $region42: #{dec_conv_block.7} parent=35 // pred_check_branch
        %267 = sbr.rel (%p265) target = $region44
      $region43: #{dec_conv_block.7} parent=35 // pred_region
        %p268 = scmp.lt.s32.totalorder %s14, 1
        %s269 = scalar_select %p268, %s14, 1
        %s270 = smul.addr %s269, 2
        %s271 = smul.addr %s270, 8
        %s272 = scalar_lea.vmem %s2, %s271
      $region44: #{dec_conv_block.7} parent=35 // pred_fallthru
        _
      // Predicated region
      $region45: #{dec_conv_block.7} parent=35 // pred_check
        %p273 = pneg %p107
      $region46: #{dec_conv_block.7} parent=35 // pred_check_branch
        %275 = sbr.rel (%p273) target = $region48
      $region47: #{dec_conv_block.7} parent=35 // pred_region
        %p276 = scmp.lt.s32.totalorder %s14, 1
        %s277 = scalar_select %p276, %s14, 1
        %s278 = smul.addr %s277, 2
        %s279 = smul.addr %s278, 8
        %s280 = scalar_lea.vmem %s3, %s279
      $region48: #{dec_conv_block.7} parent=35 // pred_fallthru
        _
    $region36: #{dec_conv_block.7} parent=5 // pred_fallthru
      _
    %p281 = scmp.le.s32.totalorder 1, %s14
    %p282 = scmp.lt.s32.totalorder %s14, 3
    %p283 = pnand %p281, %p282
    %p284 = pneg %p283
    // Predicated region
    $region49: #{dec_conv_block.7} parent=5 // pred_check
      _
    $region50: #{dec_conv_block.7} parent=5 // pred_check_branch
      %286 = sbr.rel (%p283) target = $region52
    $region51: #{dec_conv_block.7} parent=5 // pred_region
      %s287 = ssub.s32 %s14, 1
      %p288 = scmp.lt.s32.totalorder %s19, 1
      %s289 = scalar_select %p288, %s19, 1
      %s290 = smul.addr %s289, 2
      %s291 = smul.addr %s290, 8
      %s292 = scalar_lea.vmem %s0, %s291
      %p293 = pneg %p40
      %p294 = pneg %p37
      %p295 = pneg %p61
      %p296 = pneg %p58
      %p297 = scmp.lt.s32.totalorder %s19, 1
      %s298 = scalar_select %p297, %s19, 1
      %s299 = smul.addr %s298, 2
      %s300 = smul.addr %s299, 8
      %s301 = scalar_lea.vmem %s2, %s300
      %p302 = pneg %p87
      %p303 = pneg %p84
      %p304 = scmp.lt.s32.totalorder %s19, 1
      %s305 = scalar_select %p304, %s19, 1
      %s306 = smul.addr %s305, 2
      %s307 = smul.addr %s306, 8
      %s308 = scalar_lea.vmem %s3, %s307
      %p309 = pneg %p113
      %p310 = pneg %p110
      %p311 = pneg %p134
      %p312 = pneg %p131
      %p313 = pneg %p155
      %p314 = pneg %p152
      %p315 = pneg %p176
      %p316 = pneg %p173
      %p317 = pneg %p197
      %p318 = pneg %p194
      %p319 = pneg %p223
      %p320 = pneg %p220
      %p321 = scmp.lt.s32.totalorder %s19, 1
      %s322 = scalar_select %p321, %s19, 1
      %s323 = smul.addr %s322, 2
      %s324 = smul.addr %s323, 8
      %s325 = scalar_lea.vmem %s8, %s324
      %p326 = scmp.lt.s32.totalorder %s19, 1
      %s327 = scalar_select %p326, %s19, 1
      %s328 = smul.addr %s327, 2
      %s329 = smul.addr %s328, 8
      %s330 = scalar_lea.vmem %s0, %s329
      %p331 = scmp.lt.s32.totalorder %s19, 1
      %s332 = scalar_select %p331, %s19, 1
      %s333 = smul.addr %s332, 2
      %s334 = smul.addr %s333, 8
      %s335 = scalar_lea.vmem %s2, %s334
      %p336 = scmp.lt.s32.totalorder %s19, 1
      %s337 = scalar_select %p336, %s19, 1
      %s338 = smul.addr %s337, 2
      %s339 = smul.addr %s338, 8
      %s340 = scalar_lea.vmem %s3, %s339
      %p341 = scmp.lt.s32.totalorder %s19, 1
      %s342 = scalar_select %p341, %s19, 1
      %s343 = smul.addr %s342, 2
      %s344 = smul.addr %s343, 8
      %s345 = scalar_lea.vmem %s8, %s344
      %v347 = vld [vmem:[%s330] sm:$0xff]
      %v348 = vld [vmem:[%s330 + $0x8] sm:$0xff]
      %v349 = vld [vmem:[%s1] sm:$0x3]
      %v350 = vld [vmem:[%s1 + $0x2] sm:$0x3]
      %v351 = vld [vmem:[%s4] sm:$0x1]
      %v352 = vld [vmem:[%s5] sm:$0x1]
      %v353 = vld [vmem:[%s6] sm:$0xf]
      %v354 = vld [vmem:[%s6 + $0x4] sm:$0xf]
      %v355 = vld [vmem:[%s6 + $0x8] sm:$0xf]
      %v356 = vld [vmem:[%s7] sm:$0x1]
      %vm357 = vcmask 57344
      %v358 = vsel %vm357, %v349, 0.0
      %v359 = vsel %vm357, %v350, 0.0
      %v360 = vadd.f32 %v358, %v359
      %v361 = vmul.f32 %v360, 0.5
      %v362 = vsub.f32 %v349, %v361
      %v363 = vsub.f32 %v350, %v361
      %vm364 = vcmask 58369
      %v365 = vsel %vm364, %v349, 0.0
      %v366 = vsel %vm364, %v350, 0.0
      %v367 = vadd.f32 %v365, %v366
      %v368 = vmul.f32 %v362, %v362
      %v369 = vmul.f32 %v363, %v363
      %v370 = vsel %vm357, %v368, 0.0
      %v371 = vsel %vm357, %v369, 0.0
      %v372 = vadd.f32 %v370, %v371
      %v373 = vmul.f32 %v372, 16.0
      %v375 = vrot.slane %v373, 7
      %v377 = vadd.f32 %v367, %v375
      %v378 = vmul.f32 %v377, 0.03125
      %v379 = vadd.f32 %v378, 1e-05
      %v380 = vrsqrt.pop %v379
      %v383 = vunpack.c.l.s4 1966171168
      %v384 = vunpack.c.0.s8 %v383
      %v385 = vlaneseq
      %v386 = vshrl.u32 %v385, 7
      %v387 = vsub.s32 %v384, %v386
      %v388 = vrot.slane %v380, %v387
      %v389 = vcombine.high %v388, %v388
      %v391 = vunpack.c.l.s4 1966171168
      %v392 = vunpack.c.0.s8 %v391
      %v393 = vlaneseq
      %v394 = vshrl.u32 %v393, 7
      %v395 = vsub.s32 %v392, %v394
      %v396 = vrot.slane %v389, %v395
      %v398 = vmul.f32 %v351, %v396
      %v399 = vmul.f32 %v361, %v398
      %v400 = vsub.f32 %v352, %v399
      %v402 = vlaneseq
      %v403 = vshrl.u32 %v402, 7
      %v404 = vsub.s32 0, %v403
      %v405 = vrot.slane %v398, %v404
      %v407 = vmul.f32 %v347, %v405
      %v408 = vmul.f32 %v348, %v405
      %v410 = vlaneseq
      %v411 = vshrl.u32 %v410, 7
      %v412 = vsub.s32 0, %v411
      %v413 = vrot.slane %v400, %v412
      %v415 = vadd.f32 %v407, %v413
      %v416 = vadd.f32 %v408, %v413
      %vm417 = vcmp.gt.f32.partialorder %v415, 0.0
      %vm418 = vcmp.gt.f32.partialorder %v416, 0.0
      %v419 = vmul.f32 %v415, 0.01
      %v420 = vmul.f32 %v416, 0.01
      %v421 = vsel %vm417, %v415, %v419
      %v422 = vsel %vm418, %v416, %v420
      %vm425 = vcmask 1040384
      %v426 = vrot.slane %v421, 7
      %v427 = vrot.slane %v422, 7
      %v428 = vsel %vm425, %v426, %v427
      %v431 = vsel %vm425, 0.0, %v426
      %vm432 = vcmask 1046528
      %v433 = vrot.slane %v421, 1
      %v434 = vrot.slane %v422, 1
      %v435 = vsel %vm432, %v433, %v434
      %v438 = vsel %vm432, %v434, 0.0
      %v439 = vpack.c.bf16 %v428, %v431
      %v440 = vpack.c.bf16 %v422, %v421
      %vm441 = vcmask 64512
      %v443 = vsel %vm441, %v440, 0
      %vm445 = vcmask 1043456
      %v447 = vsel %vm445, %v354, 0
      %449 = vmatprep.subr.bf16.mxu0 0
      %450 = vmatpush1.bf16.msra.mxu0 %v447
      %451 = vmatprep.subr.bf16.mxu0 0
      %452 = vmatpush1.bf16.msra.mxu0 0
      %453 = vmatprep.subr.bf16.mxu0 0
      %454 = vmatpush1.bf16.msra.mxu0 0
      %455 = vmatprep.subr.bf16.mxu0 0
      %456 = vmatpush1.bf16.msra.mxu0 0
      %457 = vmatprep.subr.bf16.mxu0 0
      %458 = vmatpush1.bf16.msra.mxu0 0
      %459 = vmatprep.subr.bf16.mxu0 0
      %460 = vmatpush1.bf16.msra.mxu0 0
      %461 = vmatprep.subr.bf16.mxu0 0
      %462 = vmatpush1.bf16.msra.mxu0 0
      %463 = vmatprep.subr.bf16.mxu0 0
      %464 = vmatpush1.bf16.msra.mxu0 0
      %465 = vmatprep.subr.bf16.mxu0 0
      %466 = vmatpush1.bf16.msra.mxu0 0
      %467 = vmatprep.subr.bf16.mxu0 0
      %468 = vmatpush1.bf16.msra.mxu0 0
      %469 = vmatprep.subr.bf16.mxu0 0
      %470 = vmatpush1.bf16.msra.mxu0 0
      %471 = vmatprep.subr.bf16.mxu0 0
      %472 = vmatpush1.bf16.msra.mxu0 0
      %473 = vmatprep.subr.bf16.mxu0 0
      %474 = vmatpush1.bf16.msra.mxu0 0
      %475 = vmatprep.subr.bf16.mxu0 0
      %476 = vmatpush1.bf16.msra.mxu0 0
      %477 = vmatprep.subr.bf16.mxu0 0
      %478 = vmatpush1.bf16.msra.mxu0 0
      %479 = vmatprep.subr.bf16.mxu0 0
      %480 = vmatpush1.bf16.msra.mxu0 0
      %481 = vmatprep.mubr.bf16.mxu0 0
      %482 = vmatmul.mubr.bf16.gmra.mrb[0].mxu0 %v443
      %v483 = vpop.f32.mrb[0].mxu0
      %v484 = vadd.f32 0.0, %v483
      %v485 = vpop.f32.mrb[0].mxu0
      %v486 = vpop.f32.mrb[0].mxu0
      %v487 = vadd.f32 0.0, %v486
      %v488 = vpop.f32.mrb[0].mxu0
      %489 = vdwg.mxu0
      %v491 = vsel %vm441, %v439, 0
      %v494 = vsel %vm445, %v353, 0
      %496 = vmatprep.subr.bf16.mxu0 0
      %497 = vmatpush1.bf16.msra.mxu0 %v494
      %498 = vmatprep.subr.bf16.mxu0 0
      %499 = vmatpush1.bf16.msra.mxu0 0
      %500 = vmatprep.subr.bf16.mxu0 0
      %501 = vmatpush1.bf16.msra.mxu0 0
      %502 = vmatprep.subr.bf16.mxu0 0
      %503 = vmatpush1.bf16.msra.mxu0 0
      %504 = vmatprep.subr.bf16.mxu0 0
      %505 = vmatpush1.bf16.msra.mxu0 0
      %506 = vmatprep.subr.bf16.mxu0 0
      %507 = vmatpush1.bf16.msra.mxu0 0
      %508 = vmatprep.subr.bf16.mxu0 0
      %509 = vmatpush1.bf16.msra.mxu0 0
      %510 = vmatprep.subr.bf16.mxu0 0
      %511 = vmatpush1.bf16.msra.mxu0 0
      %512 = vmatprep.subr.bf16.mxu0 0
      %513 = vmatpush1.bf16.msra.mxu0 0
      %514 = vmatprep.subr.bf16.mxu0 0
      %515 = vmatpush1.bf16.msra.mxu0 0
      %516 = vmatprep.subr.bf16.mxu0 0
      %517 = vmatpush1.bf16.msra.mxu0 0
      %518 = vmatprep.subr.bf16.mxu0 0
      %519 = vmatpush1.bf16.msra.mxu0 0
      %520 = vmatprep.subr.bf16.mxu0 0
      %521 = vmatpush1.bf16.msra.mxu0 0
      %522 = vmatprep.subr.bf16.mxu0 0
      %523 = vmatpush1.bf16.msra.mxu0 0
      %524 = vmatprep.subr.bf16.mxu0 0
      %525 = vmatpush1.bf16.msra.mxu0 0
      %526 = vmatprep.subr.bf16.mxu0 0
      %527 = vmatpush1.bf16.msra.mxu0 0
      %528 = vmatprep.mubr.bf16.mxu0 0
      %529 = vmatmul.mubr.bf16.gmra.mrb[0].mxu0 %v491
      %v530 = vpop.f32.mrb[0].mxu0
      %v531 = vadd.f32 %v484, %v530
      %v532 = vpop.f32.mrb[0].mxu0
      %v533 = vpop.f32.mrb[0].mxu0
      %v534 = vadd.f32 %v487, %v533
      %v535 = vpop.f32.mrb[0].mxu0
      %536 = vdwg.mxu0
      %v537 = vpack.c.bf16 %v438, %v435
      %v539 = vsel %vm441, %v537, 0
      %v542 = vsel %vm445, %v355, 0
      %544 = vmatprep.subr.bf16.mxu0 0
      %545 = vmatpush1.bf16.msra.mxu0 %v542
      %546 = vmatprep.subr.bf16.mxu0 0
      %547 = vmatpush1.bf16.msra.mxu0 0
      %548 = vmatprep.subr.bf16.mxu0 0
      %549 = vmatpush1.bf16.msra.mxu0 0
      %550 = vmatprep.subr.bf16.mxu0 0
      %551 = vmatpush1.bf16.msra.mxu0 0
      %552 = vmatprep.subr.bf16.mxu0 0
      %553 = vmatpush1.bf16.msra.mxu0 0
      %554 = vmatprep.subr.bf16.mxu0 0
      %555 = vmatpush1.bf16.msra.mxu0 0
      %556 = vmatprep.subr.bf16.mxu0 0
      %557 = vmatpush1.bf16.msra.mxu0 0
      %558 = vmatprep.subr.bf16.mxu0 0
      %559 = vmatpush1.bf16.msra.mxu0 0
      %560 = vmatprep.subr.bf16.mxu0 0
      %561 = vmatpush1.bf16.msra.mxu0 0
      %562 = vmatprep.subr.bf16.mxu0 0
      %563 = vmatpush1.bf16.msra.mxu0 0
      %564 = vmatprep.subr.bf16.mxu0 0
      %565 = vmatpush1.bf16.msra.mxu0 0
      %566 = vmatprep.subr.bf16.mxu0 0
      %567 = vmatpush1.bf16.msra.mxu0 0
      %568 = vmatprep.subr.bf16.mxu0 0
      %569 = vmatpush1.bf16.msra.mxu0 0
      %570 = vmatprep.subr.bf16.mxu0 0
      %571 = vmatpush1.bf16.msra.mxu0 0
      %572 = vmatprep.subr.bf16.mxu0 0
      %573 = vmatpush1.bf16.msra.mxu0 0
      %574 = vmatprep.subr.bf16.mxu0 0
      %575 = vmatpush1.bf16.msra.mxu0 0
      %576 = vmatprep.mubr.bf16.mxu0 0
      %577 = vmatmul.mubr.bf16.gmra.mrb[0].mxu0 %v539
      %v578 = vpop.f32.mrb[0].mxu0
      %v579 = vadd.f32 0.0, %v578
      %v580 = vpop.f32.mrb[0].mxu0
      %v581 = vpop.f32.mrb[0].mxu0
      %v582 = vadd.f32 0.0, %v581
      %v583 = vpop.f32.mrb[0].mxu0
      %584 = vdwg.mxu0
      %v585 = vadd.f32 %v531, %v579
      %v586 = vadd.f32 %v534, %v582
      %v588 = vlaneseq
      %v589 = vshrl.u32 %v588, 7
      %v590 = vsub.s32 0, %v589
      %v591 = vrot.slane %v356, %v590
      %v593 = vadd.f32 %v585, %v591
      %v594 = vadd.f32 %v586, %v591
      %v595 = vld [vmem:[%s340] sm:$0xff]
      %v596 = vld [vmem:[%s340 + $0x8] sm:$0xff]
      %v597 = vld [vmem:[%s335] sm:$0xff]
      %v598 = vld [vmem:[%s335 + $0x8] sm:$0xff]
      %v599 = vadd.f32 %v595, %v597
      %v600 = vadd.f32 %v596, %v598
      %v601 = vadd.f32 %v599, %v593
      %v602 = vadd.f32 %v600, %v594
      %vm603 = vcmask 31744
      %604 = vst.msk [vmem:[%s345] sm:$0xff] %vm603, %v601
      %605 = vst.msk [vmem:[%s345 + $0x8] sm:$0xff] %vm603, %v602
      %p606 = scmp.lt.s32.totalorder %s19, 1
      %s607 = scalar_select %p606, %s19, 1
      %s608 = smul.addr %s607, 2
      %s609 = smul.addr %s608, 8
      %s610 = scalar_lea.vmem %s8, %s609
      // Predicated region
      $region53: #{dec_conv_block.7} parent=51 // pred_check
        %p611 = pneg %p220
      $region54: #{dec_conv_block.7} parent=51 // pred_check_branch
        %613 = sbr.rel (%p611) target = $region56
      $region55: #{dec_conv_block.7} parent=51 // pred_region
        _
      $region56: #{dec_conv_block.7} parent=51 // pred_fallthru
        _
    $region52: #{dec_conv_block.7} parent=5 // pred_fallthru
      _
    %p614 = scmp.le.s32.totalorder 2, %s14
    // Predicated region
    $region57: #{dec_conv_block.7} parent=5 // pred_check
      %p615 = pneg %p614
    $region58: #{dec_conv_block.7} parent=5 // pred_check_branch
      %617 = sbr.rel (%p615) target = $region60
    $region59: #{dec_conv_block.7} parent=5 // pred_region
      %s618 = ssub.s32 %s14, 2
      // Predicated region
      $region61: #{dec_conv_block.7} parent=59 // pred_check
        %p619 = pneg %p226
      $region62: #{dec_conv_block.7} parent=59 // pred_check_branch
        %621 = sbr.rel (%p619) target = $region64
      $region63: #{dec_conv_block.7} parent=59 // pred_region
        %p622 = scmp.lt.s32.totalorder %s20, 1
        %s623 = scalar_select %p622, %s20, 1
        %s624 = smul.addr %s623, 2
        %s625 = smul.addr %s624, 8
        %s626 = scalar_lea.vmem %s8, %s625
      $region64: #{dec_conv_block.7} parent=59 // pred_fallthru
        _
    $region60: #{dec_conv_block.7} parent=5 // pred_fallthru
      _
  $region6: #{dec_conv_block.7} parent=0 // loop_footer
    %s18 = sadd.s32 1, %s14
  $region7: #{dec_conv_block.7} parent=0 // loop_footer_branch
    %13 = sbr.rel target = $region3
  $region8: #{dec_conv_block.7} parent=0 // loop_exit
    _

// kernel: dec_conv_block.4
$region0: #{dec_conv_block.4}
  #allocation0 [shape = 'u32[]', space=smem, size = 0x4, offset = 0x4, fixed_abs, tag = 'smem constant byte address 0x4 - core index']
  #allocation1 [shape = 'u32[144,128]{1,0:T(1,128)}', space=vmem, size = 0x12000, scoped, tag = 'internal scratch']
  %s0 = inlined_call_operand.vmem [shape: f32[2,16,4], index: 0, kind: input, shape index: {}]
  %s1 = inlined_call_operand.vmem [shape: bf16[3,4,8], index: 1, kind: input, shape index: {}]
  %s2 = inlined_call_operand.vmem [shape: f32[2,16,8], index: 2, kind: output, shape index: {0}]
  %s3 = inlined_call_operand.vmem [shape: f32[2,2,8], index: 3, kind: output, shape index: {1}]
  %4 = xla_tuple %s2, %s3
  %s5 = sld [smem:[#allocation0]]
  $region49: #{dec_conv_block.4} parent=0
    _
  %s7 = ssub.s32 1, %s5
  %s8 = scalar_select 0, %s7, %s5
  loop: start=0, step=1, limit=4
  $region2: #{dec_conv_block.4} parent=0 // loop_pre_header
    _
  $region3: #{dec_conv_block.4} parent=0 // loop_header
    %s10 = sphi 0, %s14
    %p11 = scmp.ge.s32.totalorder %s10, 4
    %s20 = sphi 0, %s22
    %s23 = sphi 0, %s20
    %s24 = sphi 0, %s23
    %s40 = sphi 0, %s24
    %s44 = sphi 0, %s44
    %s46 = sphi 0, %s44
    %s47 = sphi 0, %s46
    %s61 = sphi 0, %s47
    %s67 = sphi 0, %s69
    %s70 = sphi 0, %s67
    %s71 = sphi 0, %s70
    %s87 = sphi 0, %s71
    %s93 = sphi 0, %s95
    %s96 = sphi 0, %s93
    %s97 = sphi 0, %s96
    %s113 = sphi 0, %s97
  $region4: #{dec_conv_block.4} parent=0 // loop_header_branch
    %13 = sbr.rel (%p11) target = $region8
  $region5: #{dec_conv_block.4} parent=0 // loop_body
    %s15 = ssub.s32 %s10, 1
    %s16 = ssub.s32 %s10, 2
    %s17 = sadd.s32 %s10, 1
    %s18 = ssub.s32 %s10, %s17
    %p19 = scmp.eq.s32.totalorder %s18, 0
    %s21 = sadd.s32 %s20, 1
    %s22 = scalar_select %p19, %s20, %s21
    %p25 = pneg %p19
    %p26 = scmp.eq.s32.totalorder %s10, 1
    %p27 = por %p25, %p26
    %p28 = scmp.ne.s32.totalorder %s20, %s23
    %p29 = scmp.eq.s32.totalorder %s10, 0
    %p30 = por %p28, %p29
    %p31 = scmp.ne.s32.totalorder %s20, %s23
    %p32 = scmp.eq.s32.totalorder %s15, 1
    %p33 = por %p31, %p32
    %p34 = scmp.ne.s32.totalorder %s23, %s24
    %p35 = scmp.eq.s32.totalorder %s15, 0
    %p36 = por %p34, %p35
    %p37 = scmp.ne.s32.totalorder %s23, %s24
    %p38 = scmp.eq.s32.totalorder %s16, 1
    %p39 = por %p37, %p38
    %p41 = scmp.ne.s32.totalorder %s24, %s40
    %p42 = scmp.eq.s32.totalorder %s16, 0
    %p43 = por %p41, %p42
    %s45 = sadd.s32 %s44, 1
    %p48 = scmp.eq.s32.totalorder %s10, 1
    %p49 = scmp.ne.s32.totalorder %s44, %s46
    %p50 = scmp.eq.s32.totalorder %s10, 0
    %p51 = por %p49, %p50
    %p52 = scmp.ne.s32.totalorder %s44, %s46
    %p53 = scmp.eq.s32.totalorder %s15, 1
    %p54 = por %p52, %p53
    %p55 = scmp.ne.s32.totalorder %s46, %s47
    %p56 = scmp.eq.s32.totalorder %s15, 0
    %p57 = por %p55, %p56
    %p58 = scmp.ne.s32.totalorder %s46, %s47
    %p59 = scmp.eq.s32.totalorder %s16, 1
    %p60 = por %p58, %p59
    %p62 = scmp.ne.s32.totalorder %s47, %s61
    %p63 = scmp.eq.s32.totalorder %s16, 0
    %p64 = por %p62, %p63
    %s65 = ssub.s32 %s10, %s17
    %p66 = scmp.eq.s32.totalorder %s65, 0
    %s68 = sadd.s32 %s67, 1
    %s69 = scalar_select %p66, %s67, %s68
    %p72 = pneg %p66
    %p73 = scmp.eq.s32.totalorder %s10, 1
    %p74 = por %p72, %p73
    %p75 = scmp.ne.s32.totalorder %s67, %s70
    %p76 = scmp.eq.s32.totalorder %s10, 0
    %p77 = por %p75, %p76
    %p78 = scmp.ne.s32.totalorder %s67, %s70
    %p79 = scmp.eq.s32.totalorder %s15, 1
    %p80 = por %p78, %p79
    %p81 = scmp.ne.s32.totalorder %s70, %s71
    %p82 = scmp.eq.s32.totalorder %s15, 0
    %p83 = por %p81, %p82
    %p84 = scmp.ne.s32.totalorder %s70, %s71
    %p85 = scmp.eq.s32.totalorder %s16, 1
    %p86 = por %p84, %p85
    %p88 = scmp.ne.s32.totalorder %s71, %s87
    %p89 = scmp.eq.s32.totalorder %s16, 0
    %p90 = por %p88, %p89
    %s91 = ssub.s32 %s10, %s17
    %p92 = scmp.eq.s32.totalorder %s91, 0
    %s94 = sadd.s32 %s93, 1
    %s95 = scalar_select %p92, %s93, %s94
    %p98 = pneg %p92
    %p99 = scmp.eq.s32.totalorder %s10, 1
    %p100 = por %p98, %p99
    %p101 = scmp.ne.s32.totalorder %s93, %s96
    %p102 = scmp.eq.s32.totalorder %s10, 0
    %p103 = por %p101, %p102
    %p104 = scmp.ne.s32.totalorder %s93, %s96
    %p105 = scmp.eq.s32.totalorder %s15, 1
    %p106 = por %p104, %p105
    %p107 = scmp.ne.s32.totalorder %s96, %s97
    %p108 = scmp.eq.s32.totalorder %s15, 0
    %p109 = por %p107, %p108
    %p110 = scmp.ne.s32.totalorder %s96, %s97
    %p111 = scmp.eq.s32.totalorder %s16, 1
    %p112 = por %p110, %p111
    %p114 = scmp.ne.s32.totalorder %s97, %s113
    %p115 = scmp.eq.s32.totalorder %s16, 0
    %p116 = por %p114, %p115
    %p117 = scmp.le.s32.totalorder 1, %s10
    %p118 = scmp.lt.s32.totalorder %s10, 3
    %p119 = pnand %p117, %p118
    %p120 = pneg %p119
    // Predicated region
    $region9: #{dec_conv_block.4} parent=5 // pred_check
      _
    $region10: #{dec_conv_block.4} parent=5 // pred_check_branch
      %122 = sbr.rel (%p119) target = $region12
    $region11: #{dec_conv_block.4} parent=5 // pred_region
      %s123 = ssub.s32 %s10, 1
      // Predicated region
      $region13: #{dec_conv_block.4} parent=11 // pred_check
        %p124 = pneg %p57
      $region14: #{dec_conv_block.4} parent=11 // pred_check_branch
        %126 = sbr.rel (%p124) target = $region16
      $region15: #{dec_conv_block.4} parent=11 // pred_region
        _
      $region16: #{dec_conv_block.4} parent=11 // pred_fallthru
        _
    $region12: #{dec_conv_block.4} parent=5 // pred_fallthru
      _
    %p127 = scmp.lt.s32.totalorder %s10, 2
    // Predicated region
    $region17: #{dec_conv_block.4} parent=5 // pred_check
      %p128 = pneg %p127
    $region18: #{dec_conv_block.4} parent=5 // pred_check_branch
      %130 = sbr.rel (%p128) target = $region20
    $region19: #{dec_conv_block.4} parent=5 // pred_region
      // Predicated region
      $region21: #{dec_conv_block.4} parent=19 // pred_check
        %p131 = pneg %p30
      $region22: #{dec_conv_block.4} parent=19 // pred_check_branch
        %133 = sbr.rel (%p131) target = $region24
      $region23: #{dec_conv_block.4} parent=19 // pred_region
        %p134 = scmp.lt.s32.totalorder %s10, 1
        %s135 = scalar_select %p134, %s10, 1
        %s136 = smul.addr %s135, 2
        %s137 = smul.addr %s136, 8
        %s138 = scalar_lea.vmem %s0, %s137
      $region24: #{dec_conv_block.4} parent=19 // pred_fallthru
        _
    $region20: #{dec_conv_block.4} parent=5 // pred_fallthru
      _
    %p139 = scmp.le.s32.totalorder 1, %s10
    %p140 = scmp.lt.s32.totalorder %s10, 3
    %p141 = pnand %p139, %p140
    %p142 = pneg %p141
    // Predicated region
    $region25: #{dec_conv_block.4} parent=5 // pred_check
      _
    $region26: #{dec_conv_block.4} parent=5 // pred_check_branch
      %144 = sbr.rel (%p141) target = $region28
    $region27: #{dec_conv_block.4} parent=5 // pred_region
      %s145 = ssub.s32 %s10, 1
      %p146 = scmp.lt.s32.totalorder %s15, 1
      %s147 = scalar_select %p146, %s15, 1
      %s148 = smul.addr %s147, 2
      %s149 = smul.addr %s148, 8
      %s150 = scalar_lea.vmem %s0, %s149
      %p151 = pneg %p36
      %p152 = pneg %p33
      %p153 = pneg %p57
      %p154 = pneg %p54
      %p155 = pneg %p83
      %p156 = pneg %p80
      %p157 = scmp.lt.s32.totalorder %s15, 1
      %s158 = scalar_select %p157, %s15, 1
      %s159 = smul.addr %s158, 2
      %s160 = smul.addr %s159, 8
      %s161 = scalar_lea.vmem %s2, %s160
      %p162 = pneg %p109
      %p163 = pneg %p106
      %p164 = scmp.lt.s32.totalorder %s15, 1
      %s165 = scalar_select %p164, %s15, 1
      %s166 = smul.addr %s165, 2
      %s167 = scalar_lea.vmem %s3, %s166
      %p168 = scmp.lt.s32.totalorder %s15, 1
      %s169 = scalar_select %p168, %s15, 1
      %s170 = smul.addr %s169, 2
      %s171 = smul.addr %s170, 8
      %s172 = scalar_lea.vmem %s0, %s171
      %p173 = scmp.lt.s32.totalorder %s15, 1
      %s174 = scalar_select %p173, %s15, 1
      %s175 = smul.addr %s174, 2
      %s176 = smul.addr %s175, 8
      %s177 = scalar_lea.vmem %s2, %s176
      %p178 = scmp.lt.s32.totalorder %s15, 1
      %s179 = scalar_select %p178, %s15, 1
      %s180 = smul.addr %s179, 2
      %s181 = scalar_lea.vmem %s3, %s180
      %v183 = vld [vmem:[%s172] sm:$0xff]
      %v184 = vld [vmem:[%s172 + $0x8] sm:$0xff]
      %v185 = vld [vmem:[%s1] sm:$0x3]
      %v186 = vld [vmem:[%s1 + $0x2] sm:$0x3]
      %v187 = vld [vmem:[%s1 + $0x4] sm:$0x3]
      %vm190 = vcmask 1040384
      %v191 = vrot.slane %v183, 7
      %v192 = vrot.slane %v184, 7
      %v193 = vsel %vm190, %v191, %v192
      %v196 = vsel %vm190, 0.0, %v191
      %vm197 = vcmask 1046528
      %v198 = vrot.slane %v183, 1
      %v199 = vrot.slane %v184, 1
      %v200 = vsel %vm197, %v198, %v199
      %v203 = vsel %vm197, %v199, 0.0
      %v204 = vpack.c.bf16 %v193, %v196
      %v205 = vpack.c.bf16 %v184, %v183
      %vm206 = vcmask 31744
      %v208 = vsel %vm206, %v205, 0
      %vm210 = vcmask 1041408
      %v212 = vsel %vm210, %v186, 0
      %214 = vmatprep.subr.bf16.mxu0 0
      %215 = vmatpush1.bf16.msra.mxu0 %v212
      %216 = vmatprep.subr.bf16.mxu0 0
      %217 = vmatpush1.bf16.msra.mxu0 0
      %218 = vmatprep.subr.bf16.mxu0 0
      %219 = vmatpush1.bf16.msra.mxu0 0
      %220 = vmatprep.subr.bf16.mxu0 0
      %221 = vmatpush1.bf16.msra.mxu0 0
      %222 = vmatprep.subr.bf16.mxu0 0
      %223 = vmatpush1.bf16.msra.mxu0 0
      %224 = vmatprep.subr.bf16.mxu0 0
      %225 = vmatpush1.bf16.msra.mxu0 0
      %226 = vmatprep.subr.bf16.mxu0 0
      %227 = vmatpush1.bf16.msra.mxu0 0
      %228 = vmatprep.subr.bf16.mxu0 0
      %229 = vmatpush1.bf16.msra.mxu0 0
      %230 = vmatprep.subr.bf16.mxu0 0
      %231 = vmatpush1.bf16.msra.mxu0 0
      %232 = vmatprep.subr.bf16.mxu0 0
      %233 = vmatpush1.bf16.msra.mxu0 0
      %234 = vmatprep.subr.bf16.mxu0 0
      %235 = vmatpush1.bf16.msra.mxu0 0
      %236 = vmatprep.subr.bf16.mxu0 0
      %237 = vmatpush1.bf16.msra.mxu0 0
      %238 = vmatprep.subr.bf16.mxu0 0
      %239 = vmatpush1.bf16.msra.mxu0 0
      %240 = vmatprep.subr.bf16.mxu0 0
      %241 = vmatpush1.bf16.msra.mxu0 0
      %242 = vmatprep.subr.bf16.mxu0 0
      %243 = vmatpush1.bf16.msra.mxu0 0
      %244 = vmatprep.subr.bf16.mxu0 0
      %245 = vmatpush1.bf16.msra.mxu0 0
      %246 = vmatprep.mubr.bf16.mxu0 0
      %247 = vmatmul.mubr.bf16.gmra.mrb[0].mxu0 %v208
      %v248 = vpop.f32.mrb[0].mxu0
      %v249 = vadd.f32 0.0, %v248
      %v250 = vpop.f32.mrb[0].mxu0
      %v251 = vpop.f32.mrb[0].mxu0
      %v252 = vadd.f32 0.0, %v251
      %v253 = vpop.f32.mrb[0].mxu0
      %254 = vdwg.mxu0
      %v256 = vsel %vm206, %v204, 0
      %v259 = vsel %vm210, %v185, 0
      %261 = vmatprep.subr.bf16.mxu0 0
      %262 = vmatpush1.bf16.msra.mxu0 %v259
      %263 = vmatprep.subr.bf16.mxu0 0
      %264 = vmatpush1.bf16.msra.mxu0 0
      %265 = vmatprep.subr.bf16.mxu0 0
      %266 = vmatpush1.bf16.msra.mxu0 0
      %267 = vmatprep.subr.bf16.mxu0 0
      %268 = vmatpush1.bf16.msra.mxu0 0
      %269 = vmatprep.subr.bf16.mxu0 0
      %270 = vmatpush1.bf16.msra.mxu0 0
      %271 = vmatprep.subr.bf16.mxu0 0
      %272 = vmatpush1.bf16.msra.mxu0 0
      %273 = vmatprep.subr.bf16.mxu0 0
      %274 = vmatpush1.bf16.msra.mxu0 0
      %275 = vmatprep.subr.bf16.mxu0 0
      %276 = vmatpush1.bf16.msra.mxu0 0
      %277 = vmatprep.subr.bf16.mxu0 0
      %278 = vmatpush1.bf16.msra.mxu0 0
      %279 = vmatprep.subr.bf16.mxu0 0
      %280 = vmatpush1.bf16.msra.mxu0 0
      %281 = vmatprep.subr.bf16.mxu0 0
      %282 = vmatpush1.bf16.msra.mxu0 0
      %283 = vmatprep.subr.bf16.mxu0 0
      %284 = vmatpush1.bf16.msra.mxu0 0
      %285 = vmatprep.subr.bf16.mxu0 0
      %286 = vmatpush1.bf16.msra.mxu0 0
      %287 = vmatprep.subr.bf16.mxu0 0
      %288 = vmatpush1.bf16.msra.mxu0 0
      %289 = vmatprep.subr.bf16.mxu0 0
      %290 = vmatpush1.bf16.msra.mxu0 0
      %291 = vmatprep.subr.bf16.mxu0 0
      %292 = vmatpush1.bf16.msra.mxu0 0
      %293 = vmatprep.mubr.bf16.mxu0 0
      %294 = vmatmul.mubr.bf16.gmra.mrb[0].mxu0 %v256
      %v295 = vpop.f32.mrb[0].mxu0
      %v296 = vadd.f32 %v249, %v295
      %v297 = vpop.f32.mrb[0].mxu0
      %v298 = vpop.f32.mrb[0].mxu0
      %v299 = vadd.f32 %v252, %v298
      %v300 = vpop.f32.mrb[0].mxu0
      %301 = vdwg.mxu0
      %v302 = vpack.c.bf16 %v203, %v200
      %v304 = vsel %vm206, %v302, 0
      %v307 = vsel %vm210, %v187, 0
      %309 = vmatprep.subr.bf16.mxu0 0
      %310 = vmatpush1.bf16.msra.mxu0 %v307
      %311 = vmatprep.subr.bf16.mxu0 0
      %312 = vmatpush1.bf16.msra.mxu0 0
      %313 = vmatprep.subr.bf16.mxu0 0
      %314 = vmatpush1.bf16.msra.mxu0 0
      %315 = vmatprep.subr.bf16.mxu0 0
      %316 = vmatpush1.bf16.msra.mxu0 0
      %317 = vmatprep.subr.bf16.mxu0 0
      %318 = vmatpush1.bf16.msra.mxu0 0
      %319 = vmatprep.subr.bf16.mxu0 0
      %320 = vmatpush1.bf16.msra.mxu0 0
      %321 = vmatprep.subr.bf16.mxu0 0
      %322 = vmatpush1.bf16.msra.mxu0 0
      %323 = vmatprep.subr.bf16.mxu0 0
      %324 = vmatpush1.bf16.msra.mxu0 0
      %325 = vmatprep.subr.bf16.mxu0 0
      %326 = vmatpush1.bf16.msra.mxu0 0
      %327 = vmatprep.subr.bf16.mxu0 0
      %328 = vmatpush1.bf16.msra.mxu0 0
      %329 = vmatprep.subr.bf16.mxu0 0
      %330 = vmatpush1.bf16.msra.mxu0 0
      %331 = vmatprep.subr.bf16.mxu0 0
      %332 = vmatpush1.bf16.msra.mxu0 0
      %333 = vmatprep.subr.bf16.mxu0 0
      %334 = vmatpush1.bf16.msra.mxu0 0
      %335 = vmatprep.subr.bf16.mxu0 0
      %336 = vmatpush1.bf16.msra.mxu0 0
      %337 = vmatprep.subr.bf16.mxu0 0
      %338 = vmatpush1.bf16.msra.mxu0 0
      %339 = vmatprep.subr.bf16.mxu0 0
      %340 = vmatpush1.bf16.msra.mxu0 0
      %341 = vmatprep.mubr.bf16.mxu0 0
      %342 = vmatmul.mubr.bf16.gmra.mrb[0].mxu0 %v304
      %v343 = vpop.f32.mrb[0].mxu0
      %v344 = vadd.f32 0.0, %v343
      %v345 = vpop.f32.mrb[0].mxu0
      %v346 = vpop.f32.mrb[0].mxu0
      %v347 = vadd.f32 0.0, %v346
      %v348 = vpop.f32.mrb[0].mxu0
      %349 = vdwg.mxu0
      %v350 = vadd.f32 %v296, %v344
      %v351 = vadd.f32 %v299, %v347
      %vm352 = vcmask 64512
      %353 = vst.msk [vmem:[%s177] sm:$0xff] %vm352, %v350
      %354 = vst.msk [vmem:[%s177 + $0x8] sm:$0xff] %vm352, %v351
      %v355 = vsel %vm352, %v350, 0.0
      %v356 = vsel %vm352, %v351, 0.0
      %v357 = vadd.f32 %v355, %v356
      %v358 = vrot.slane %v357, 4
      %v359 = vadd.f32 %v357, %v358
      %v360 = vrot.slane %v359, 2
      %v361 = vadd.f32 %v359, %v360
      %v362 = vrot.slane %v361, 1
      %v363 = vadd.f32 %v361, %v362
      %v364 = vmul.f32 %v363, 0.0625
      %v365 = vsub.f32 %v350, %v364
      %v366 = vsub.f32 %v351, %v364
      %v367 = vmul.f32 %v365, %v365
      %v368 = vmul.f32 %v366, %v366
      %v369 = vsel %vm352, %v367, 0.0
      %v370 = vsel %vm352, %v368, 0.0
      %v371 = vadd.f32 %v369, %v370
      %v372 = vrot.slane %v371, 4
      %v373 = vadd.f32 %v371, %v372
      %v374 = vrot.slane %v373, 2
      %v375 = vadd.f32 %v373, %v374
      %v376 = vrot.slane %v375, 1
      %v377 = vadd.f32 %v375, %v376
      %v378 = vsel %vm190, %v364, %v377
      %vm379 = vcmask 58368
      %380 = vst.msk [vmem:[%s181] sm:$0x3] %vm379, %v378
      %p381 = scmp.lt.s32.totalorder %s15, 1
      %s382 = scalar_select %p381, %s15, 1
      %s383 = smul.addr %s382, 2
      %s384 = smul.addr %s383, 8
      %s385 = scalar_lea.vmem %s2, %s384
      %p386 = scmp.lt.s32.totalorder %s15, 1
      %s387 = scalar_select %p386, %s15, 1
      %s388 = smul.addr %s387, 2
      %s389 = scalar_lea.vmem %s3, %s388
      // Predicated region
      $region29: #{dec_conv_block.4} parent=27 // pred_check
        %p390 = pneg %p80
      $region30: #{dec_conv_block.4} parent=27 // pred_check_branch
        %392 = sbr.rel (%p390) target = $region32
      $region31: #{dec_conv_block.4} parent=27 // pred_region
        _
      $region32: #{dec_conv_block.4} parent=27 // pred_fallthru
        _
      // Predicated region
      $region33: #{dec_conv_block.4} parent=27 // pred_check
        %p393 = pneg %p106
      $region34: #{dec_conv_block.4} parent=27 // pred_check_branch
        %395 = sbr.rel (%p393) target = $region36
      $region35: #{dec_conv_block.4} parent=27 // pred_region
        _
      $region36: #{dec_conv_block.4} parent=27 // pred_fallthru
        _
    $region28: #{dec_conv_block.4} parent=5 // pred_fallthru
      _
    %p396 = scmp.le.s32.totalorder 2, %s10
    // Predicated region
    $region37: #{dec_conv_block.4} parent=5 // pred_check
      %p397 = pneg %p396
    $region38: #{dec_conv_block.4} parent=5 // pred_check_branch
      %399 = sbr.rel (%p397) target = $region40
    $region39: #{dec_conv_block.4} parent=5 // pred_region
      %s400 = ssub.s32 %s10, 2
      // Predicated region
      $region41: #{dec_conv_block.4} parent=39 // pred_check
        %p401 = pneg %p86
      $region42: #{dec_conv_block.4} parent=39 // pred_check_branch
        %403 = sbr.rel (%p401) target = $region44
      $region43: #{dec_conv_block.4} parent=39 // pred_region
        %p404 = scmp.lt.s32.totalorder %s16, 1
        %s405 = scalar_select %p404, %s16, 1
        %s406 = smul.addr %s405, 2
        %s407 = smul.addr %s406, 8
        %s408 = scalar_lea.vmem %s2, %s407
      $region44: #{dec_conv_block.4} parent=39 // pred_fallthru
        _
      // Predicated region
      $region45: #{dec_conv_block.4} parent=39 // pred_check
        %p409 = pneg %p112
      $region46: #{dec_conv_block.4} parent=39 // pred_check_branch
        %411 = sbr.rel (%p409) target = $region48
      $region47: #{dec_conv_block.4} parent=39 // pred_region
        %p412 = scmp.lt.s32.totalorder %s16, 1
        %s413 = scalar_select %p412, %s16, 1
        %s414 = smul.addr %s413, 2
        %s415 = scalar_lea.vmem %s3, %s414
      $region48: #{dec_conv_block.4} parent=39 // pred_fallthru
        _
    $region40: #{dec_conv_block.4} parent=5 // pred_fallthru
      _
  $region6: #{dec_conv_block.4} parent=0 // loop_footer
    %s14 = sadd.s32 1, %s10
  $region7: #{dec_conv_block.4} parent=0 // loop_footer_branch
    %9 = sbr.rel target = $region3
  $region8: #{dec_conv_block.4} parent=0 // loop_exit
    _

// kernel: dec_conv_block.5
$region0: #{dec_conv_block.5}
  #allocation0 [shape = 'u32[]', space=smem, size = 0x4, offset = 0x4, fixed_abs, tag = 'smem constant byte address 0x4 - core index']
  #allocation1 [shape = 'u32[144,128]{1,0:T(1,128)}', space=vmem, size = 0x12000, scoped, tag = 'internal scratch']
  %s0 = inlined_call_operand.vmem [shape: f32[2,16,8], index: 0, kind: input, shape index: {}]
  %s1 = inlined_call_operand.vmem [shape: f32[2,2,8], index: 1, kind: input, shape index: {}]
  %s2 = inlined_call_operand.vmem [shape: f32[1,1,8], index: 2, kind: input, shape index: {}]
  %s3 = inlined_call_operand.vmem [shape: f32[1,1,8], index: 3, kind: input, shape index: {}]
  %s4 = inlined_call_operand.vmem [shape: bf16[3,8,4], index: 4, kind: input, shape index: {}]
  %s5 = inlined_call_operand.vmem [shape: f32[1,1,4], index: 5, kind: input, shape index: {}]
  %s6 = inlined_call_operand.vmem [shape: f32[2,16,4], index: 6, kind: output, shape index: {}]
  %s7 = sld [smem:[#allocation0]]
  $region57: #{dec_conv_block.5} parent=0
    _
  %s9 = ssub.s32 1, %s7
  %s10 = scalar_select 0, %s9, %s7
  loop: start=0, step=1, limit=4
  $region2: #{dec_conv_block.5} parent=0 // loop_pre_header
    _
  $region3: #{dec_conv_block.5} parent=0 // loop_header
    %s12 = sphi 0, %s16
    %p13 = scmp.ge.s32.totalorder %s12, 4
    %s22 = sphi 0, %s24
    %s25 = sphi 0, %s22
    %s26 = sphi 0, %s25
    %s42 = sphi 0, %s26
    %s46 = sphi 0, %s46
    %s48 = sphi 0, %s46
    %s49 = sphi 0, %s48
    %s63 = sphi 0, %s49
    %s67 = sphi 0, %s67
    %s69 = sphi 0, %s67
    %s70 = sphi 0, %s69
    %s84 = sphi 0, %s70
    %s88 = sphi 0, %s88
    %s90 = sphi 0, %s88
    %s91 = sphi 0, %s90
    %s105 = sphi 0, %s91
    %s109 = sphi 0, %s109
    %s111 = sphi 0, %s109
    %s112 = sphi 0, %s111
    %s126 = sphi 0, %s112
    %s130 = sphi 0, %s130
    %s132 = sphi 0, %s130
    %s133 = sphi 0, %s132
    %s147 = sphi 0, %s133
    %s153 = sphi 0, %s155
    %s156 = sphi 0, %s153
    %s157 = sphi 0, %s156
    %s173 = sphi 0, %s157
  $region4: #{dec_conv_block.5} parent=0 // loop_header_branch
    %15 = sbr.rel (%p13) target = $region8
  $region5: #{dec_conv_block.5} parent=0 // loop_body
    %s17 = ssub.s32 %s12, 1
    %s18 = ssub.s32 %s12, 2
    %s19 = sadd.s32 %s12, 1
    %s20 = ssub.s32 %s12, %s19
    %p21 = scmp.eq.s32.totalorder %s20, 0
    %s23 = sadd.s32 %s22, 1
    %s24 = scalar_select %p21, %s22, %s23
    %p27 = pneg %p21
    %p28 = scmp.eq.s32.totalorder %s12, 1
    %p29 = por %p27, %p28
    %p30 = scmp.ne.s32.totalorder %s22, %s25
    %p31 = scmp.eq.s32.totalorder %s12, 0
    %p32 = por %p30, %p31
    %p33 = scmp.ne.s32.totalorder %s22, %s25
    %p34 = scmp.eq.s32.totalorder %s17, 1
    %p35 = por %p33, %p34
    %p36 = scmp.ne.s32.totalorder %s25, %s26
    %p37 = scmp.eq.s32.totalorder %s17, 0
    %p38 = por %p36, %p37
    %p39 = scmp.ne.s32.totalorder %s25, %s26
    %p40 = scmp.eq.s32.totalorder %s18, 1
    %p41 = por %p39, %p40
    %p43 = scmp.ne.s32.totalorder %s26, %s42
    %p44 = scmp.eq.s32.totalorder %s18, 0
    %p45 = por %p43, %p44
    %s47 = sadd.s32 %s46, 1
    %p50 = scmp.eq.s32.totalorder %s12, 1
    %p51 = scmp.ne.s32.totalorder %s46, %s48
    %p52 = scmp.eq.s32.totalorder %s12, 0
    %p53 = por %p51, %p52
    %p54 = scmp.ne.s32.totalorder %s46, %s48
    %p55 = scmp.eq.s32.totalorder %s17, 1
    %p56 = por %p54, %p55
    %p57 = scmp.ne.s32.totalorder %s48, %s49
    %p58 = scmp.eq.s32.totalorder %s17, 0
    %p59 = por %p57, %p58
    %p60 = scmp.ne.s32.totalorder %s48, %s49
    %p61 = scmp.eq.s32.totalorder %s18, 1
    %p62 = por %p60, %p61
    %p64 = scmp.ne.s32.totalorder %s49, %s63
    %p65 = scmp.eq.s32.totalorder %s18, 0
    %p66 = por %p64, %p65
    %s68 = sadd.s32 %s67, 1
    %p71 = scmp.eq.s32.totalorder %s12, 1
    %p72 = scmp.ne.s32.totalorder %s67, %s69
    %p73 = scmp.eq.s32.totalorder %s12, 0
    %p74 = por %p72, %p73
    %p75 = scmp.ne.s32.totalorder %s67, %s69
    %p76 = scmp.eq.s32.totalorder %s17, 1
    %p77 = por %p75, %p76
    %p78 = scmp.ne.s32.totalorder %s69, %s70
    %p79 = scmp.eq.s32.totalorder %s17, 0
    %p80 = por %p78, %p79
    %p81 = scmp.ne.s32.totalorder %s69, %s70
    %p82 = scmp.eq.s32.totalorder %s18, 1
    %p83 = por %p81, %p82
    %p85 = scmp.ne.s32.totalorder %s70, %s84
    %p86 = scmp.eq.s32.totalorder %s18, 0
    %p87 = por %p85, %p86
    %s89 = sadd.s32 %s88, 1
    %p92 = scmp.eq.s32.totalorder %s12, 1
    %p93 = scmp.ne.s32.totalorder %s88, %s90
    %p94 = scmp.eq.s32.totalorder %s12, 0
    %p95 = por %p93, %p94
    %p96 = scmp.ne.s32.totalorder %s88, %s90
    %p97 = scmp.eq.s32.totalorder %s17, 1
    %p98 = por %p96, %p97
    %p99 = scmp.ne.s32.totalorder %s90, %s91
    %p100 = scmp.eq.s32.totalorder %s17, 0
    %p101 = por %p99, %p100
    %p102 = scmp.ne.s32.totalorder %s90, %s91
    %p103 = scmp.eq.s32.totalorder %s18, 1
    %p104 = por %p102, %p103
    %p106 = scmp.ne.s32.totalorder %s91, %s105
    %p107 = scmp.eq.s32.totalorder %s18, 0
    %p108 = por %p106, %p107
    %s110 = sadd.s32 %s109, 1
    %p113 = scmp.eq.s32.totalorder %s12, 1
    %p114 = scmp.ne.s32.totalorder %s109, %s111
    %p115 = scmp.eq.s32.totalorder %s12, 0
    %p116 = por %p114, %p115
    %p117 = scmp.ne.s32.totalorder %s109, %s111
    %p118 = scmp.eq.s32.totalorder %s17, 1
    %p119 = por %p117, %p118
    %p120 = scmp.ne.s32.totalorder %s111, %s112
    %p121 = scmp.eq.s32.totalorder %s17, 0
    %p122 = por %p120, %p121
    %p123 = scmp.ne.s32.totalorder %s111, %s112
    %p124 = scmp.eq.s32.totalorder %s18, 1
    %p125 = por %p123, %p124
    %p127 = scmp.ne.s32.totalorder %s112, %s126
    %p128 = scmp.eq.s32.totalorder %s18, 0
    %p129 = por %p127, %p128
    %s131 = sadd.s32 %s130, 1
    %p134 = scmp.eq.s32.totalorder %s12, 1
    %p135 = scmp.ne.s32.totalorder %s130, %s132
    %p136 = scmp.eq.s32.totalorder %s12, 0
    %p137 = por %p135, %p136
    %p138 = scmp.ne.s32.totalorder %s130, %s132
    %p139 = scmp.eq.s32.totalorder %s17, 1
    %p140 = por %p138, %p139
    %p141 = scmp.ne.s32.totalorder %s132, %s133
    %p142 = scmp.eq.s32.totalorder %s17, 0
    %p143 = por %p141, %p142
    %p144 = scmp.ne.s32.totalorder %s132, %s133
    %p145 = scmp.eq.s32.totalorder %s18, 1
    %p146 = por %p144, %p145
    %p148 = scmp.ne.s32.totalorder %s133, %s147
    %p149 = scmp.eq.s32.totalorder %s18, 0
    %p150 = por %p148, %p149
    %s151 = ssub.s32 %s12, %s19
    %p152 = scmp.eq.s32.totalorder %s151, 0
    %s154 = sadd.s32 %s153, 1
    %s155 = scalar_select %p152, %s153, %s154
    %p158 = pneg %p152
    %p159 = scmp.eq.s32.totalorder %s12, 1
    %p160 = por %p158, %p159
    %p161 = scmp.ne.s32.totalorder %s153, %s156
    %p162 = scmp.eq.s32.totalorder %s12, 0
    %p163 = por %p161, %p162
    %p164 = scmp.ne.s32.totalorder %s153, %s156
    %p165 = scmp.eq.s32.totalorder %s17, 1
    %p166 = por %p164, %p165
    %p167 = scmp.ne.s32.totalorder %s156, %s157
    %p168 = scmp.eq.s32.totalorder %s17, 0
    %p169 = por %p167, %p168
    %p170 = scmp.ne.s32.totalorder %s156, %s157
    %p171 = scmp.eq.s32.totalorder %s18, 1
    %p172 = por %p170, %p171
    %p174 = scmp.ne.s32.totalorder %s157, %s173
    %p175 = scmp.eq.s32.totalorder %s18, 0
    %p176 = por %p174, %p175
    %p177 = scmp.le.s32.totalorder 1, %s12
    %p178 = scmp.lt.s32.totalorder %s12, 3
    %p179 = pnand %p177, %p178
    %p180 = pneg %p179
    // Predicated region
    $region9: #{dec_conv_block.5} parent=5 // pred_check
      _
    $region10: #{dec_conv_block.5} parent=5 // pred_check_branch
      %182 = sbr.rel (%p179) target = $region12
    $region11: #{dec_conv_block.5} parent=5 // pred_region
      %s183 = ssub.s32 %s12, 1
      // Predicated region
      $region13: #{dec_conv_block.5} parent=11 // pred_check
        %p184 = pneg %p59
      $region14: #{dec_conv_block.5} parent=11 // pred_check_branch
        %186 = sbr.rel (%p184) target = $region16
      $region15: #{dec_conv_block.5} parent=11 // pred_region
        _
      $region16: #{dec_conv_block.5} parent=11 // pred_fallthru
        _
      // Predicated region
      $region17: #{dec_conv_block.5} parent=11 // pred_check
        %p187 = pneg %p80
      $region18: #{dec_conv_block.5} parent=11 // pred_check_branch
        %189 = sbr.rel (%p187) target = $region20
      $region19: #{dec_conv_block.5} parent=11 // pred_region
        _
      $region20: #{dec_conv_block.5} parent=11 // pred_fallthru
        _
      // Predicated region
      $region21: #{dec_conv_block.5} parent=11 // pred_check
        %p190 = pneg %p101
      $region22: #{dec_conv_block.5} parent=11 // pred_check_branch
        %192 = sbr.rel (%p190) target = $region24
      $region23: #{dec_conv_block.5} parent=11 // pred_region
        _
      $region24: #{dec_conv_block.5} parent=11 // pred_fallthru
        _
      // Predicated region
      $region25: #{dec_conv_block.5} parent=11 // pred_check
        %p193 = pneg %p122
      $region26: #{dec_conv_block.5} parent=11 // pred_check_branch
        %195 = sbr.rel (%p193) target = $region28
      $region27: #{dec_conv_block.5} parent=11 // pred_region
        _
      $region28: #{dec_conv_block.5} parent=11 // pred_fallthru
        _
      // Predicated region
      $region29: #{dec_conv_block.5} parent=11 // pred_check
        %p196 = pneg %p143
      $region30: #{dec_conv_block.5} parent=11 // pred_check_branch
        %198 = sbr.rel (%p196) target = $region32
      $region31: #{dec_conv_block.5} parent=11 // pred_region
        _
      $region32: #{dec_conv_block.5} parent=11 // pred_fallthru
        _
    $region12: #{dec_conv_block.5} parent=5 // pred_fallthru
      _
    %p199 = scmp.lt.s32.totalorder %s12, 2
    // Predicated region
    $region33: #{dec_conv_block.5} parent=5 // pred_check
      %p200 = pneg %p199
    $region34: #{dec_conv_block.5} parent=5 // pred_check_branch
      %202 = sbr.rel (%p200) target = $region36
    $region35: #{dec_conv_block.5} parent=5 // pred_region
      // Predicated region
      $region37: #{dec_conv_block.5} parent=35 // pred_check
        %p203 = pneg %p32
      $region38: #{dec_conv_block.5} parent=35 // pred_check_branch
        %205 = sbr.rel (%p203) target = $region40
      $region39: #{dec_conv_block.5} parent=35 // pred_region
        %p206 = scmp.lt.s32.totalorder %s12, 1
        %s207 = scalar_select %p206, %s12, 1
        %s208 = smul.addr %s207, 2
        %s209 = smul.addr %s208, 8
        %s210 = scalar_lea.vmem %s0, %s209
      $region40: #{dec_conv_block.5} parent=35 // pred_fallthru
        _
    $region36: #{dec_conv_block.5} parent=5 // pred_fallthru
      _
    %p211 = scmp.le.s32.totalorder 1, %s12
    %p212 = scmp.lt.s32.totalorder %s12, 3
    %p213 = pnand %p211, %p212
    %p214 = pneg %p213
    // Predicated region
    $region41: #{dec_conv_block.5} parent=5 // pred_check
      _
    $region42: #{dec_conv_block.5} parent=5 // pred_check_branch
      %216 = sbr.rel (%p213) target = $region44
    $region43: #{dec_conv_block.5} parent=5 // pred_region
      %s217 = ssub.s32 %s12, 1
      %p218 = scmp.lt.s32.totalorder %s17, 1
      %s219 = scalar_select %p218, %s17, 1
      %s220 = smul.addr %s219, 2
      %s221 = smul.addr %s220, 8
      %s222 = scalar_lea.vmem %s0, %s221
      %p223 = pneg %p38
      %p224 = pneg %p35
      %p225 = pneg %p59
      %p226 = pneg %p56
      %p227 = pneg %p80
      %p228 = pneg %p77
      %p229 = pneg %p101
      %p230 = pneg %p98
      %p231 = pneg %p122
      %p232 = pneg %p119
      %p233 = pneg %p143
      %p234 = pneg %p140
      %p235 = pneg %p169
      %p236 = pneg %p166
      %p237 = scmp.lt.s32.totalorder %s17, 1
      %s238 = scalar_select %p237, %s17, 1
      %s239 = smul.addr %s238, 2
      %s240 = smul.addr %s239, 8
      %s241 = scalar_lea.vmem %s6, %s240
      %p242 = scmp.lt.s32.totalorder %s17, 1
      %s243 = scalar_select %p242, %s17, 1
      %s244 = smul.addr %s243, 2
      %s245 = smul.addr %s244, 8
      %s246 = scalar_lea.vmem %s0, %s245
      %p247 = scmp.lt.s32.totalorder %s17, 1
      %s248 = scalar_select %p247, %s17, 1
      %s249 = smul.addr %s248, 2
      %s250 = smul.addr %s249, 8
      %s251 = scalar_lea.vmem %s6, %s250
      %v253 = vld [vmem:[%s246] sm:$0xff]
      %v254 = vld [vmem:[%s246 + $0x8] sm:$0xff]
      %v255 = vld [vmem:[%s1] sm:$0x3]
      %v256 = vld [vmem:[%s1 + $0x2] sm:$0x3]
      %v257 = vld [vmem:[%s2] sm:$0x1]
      %v258 = vld [vmem:[%s3] sm:$0x1]
      %v259 = vld [vmem:[%s4] sm:$0xf]
      %v260 = vld [vmem:[%s4 + $0x4] sm:$0xf]
      %v261 = vld [vmem:[%s4 + $0x8] sm:$0xf]
      %v262 = vld [vmem:[%s5] sm:$0x1]
      %vm263 = vcmask 57344
      %v264 = vsel %vm263, %v255, 0.0
      %v265 = vsel %vm263, %v256, 0.0
      %v266 = vadd.f32 %v264, %v265
      %v267 = vmul.f32 %v266, 0.5
      %v268 = vsub.f32 %v255, %v267
      %v269 = vsub.f32 %v256, %v267
      %vm270 = vcmask 58369
      %v271 = vsel %vm270, %v255, 0.0
      %v272 = vsel %vm270, %v256, 0.0
      %v273 = vadd.f32 %v271, %v272
      %v274 = vmul.f32 %v268, %v268
      %v275 = vmul.f32 %v269, %v269
      %v276 = vsel %vm263, %v274, 0.0
      %v277 = vsel %vm263, %v275, 0.0
      %v278 = vadd.f32 %v276, %v277
      %v279 = vmul.f32 %v278, 16.0
      %v281 = vrot.slane %v279, 7
      %v283 = vadd.f32 %v273, %v281
      %v284 = vmul.f32 %v283, 0.03125
      %v285 = vadd.f32 %v284, 1e-05
      %v286 = vrsqrt.pop %v285
      %v289 = vunpack.c.l.s4 1966171168
      %v290 = vunpack.c.0.s8 %v289
      %v291 = vlaneseq
      %v292 = vshrl.u32 %v291, 7
      %v293 = vsub.s32 %v290, %v292
      %v294 = vrot.slane %v286, %v293
      %v295 = vcombine.high %v294, %v294
      %v297 = vunpack.c.l.s4 1966171168
      %v298 = vunpack.c.0.s8 %v297
      %v299 = vlaneseq
      %v300 = vshrl.u32 %v299, 7
      %v301 = vsub.s32 %v298, %v300
      %v302 = vrot.slane %v295, %v301
      %v304 = vmul.f32 %v257, %v302
      %v305 = vmul.f32 %v267, %v304
      %v306 = vsub.f32 %v258, %v305
      %v308 = vlaneseq
      %v309 = vshrl.u32 %v308, 7
      %v310 = vsub.s32 0, %v309
      %v311 = vrot.slane %v304, %v310
      %v313 = vmul.f32 %v253, %v311
      %v314 = vmul.f32 %v254, %v311
      %v316 = vlaneseq
      %v317 = vshrl.u32 %v316, 7
      %v318 = vsub.s32 0, %v317
      %v319 = vrot.slane %v306, %v318
      %v321 = vadd.f32 %v313, %v319
      %v322 = vadd.f32 %v314, %v319
      %vm323 = vcmp.gt.f32.partialorder %v321, 0.0
      %vm324 = vcmp.gt.f32.partialorder %v322, 0.0
      %v325 = vmul.f32 %v321, 0.01
      %v326 = vmul.f32 %v322, 0.01
      %v327 = vsel %vm323, %v321, %v325
      %v328 = vsel %vm324, %v322, %v326
      %vm331 = vcmask 1040384
      %v332 = vrot.slane %v327, 7
      %v333 = vrot.slane %v328, 7
      %v334 = vsel %vm331, %v332, %v333
      %v337 = vsel %vm331, 0.0, %v332
      %vm338 = vcmask 1046528
      %v339 = vrot.slane %v327, 1
      %v340 = vrot.slane %v328, 1
      %v341 = vsel %vm338, %v339, %v340
      %v344 = vsel %vm338, %v340, 0.0
      %v345 = vpack.c.bf16 %v334, %v337
      %v346 = vpack.c.bf16 %v328, %v327
      %vm347 = vcmask 64512
      %v349 = vsel %vm347, %v346, 0
      %vm351 = vcmask 1043456
      %v353 = vsel %vm351, %v260, 0
      %355 = vmatprep.subr.bf16.mxu0 0
      %356 = vmatpush1.bf16.msra.mxu0 %v353
      %357 = vmatprep.subr.bf16.mxu0 0
      %358 = vmatpush1.bf16.msra.mxu0 0
      %359 = vmatprep.subr.bf16.mxu0 0
      %360 = vmatpush1.bf16.msra.mxu0 0
      %361 = vmatprep.subr.bf16.mxu0 0
      %362 = vmatpush1.bf16.msra.mxu0 0
      %363 = vmatprep.subr.bf16.mxu0 0
      %364 = vmatpush1.bf16.msra.mxu0 0
      %365 = vmatprep.subr.bf16.mxu0 0
      %366 = vmatpush1.bf16.msra.mxu0 0
      %367 = vmatprep.subr.bf16.mxu0 0
      %368 = vmatpush1.bf16.msra.mxu0 0
      %369 = vmatprep.subr.bf16.mxu0 0
      %370 = vmatpush1.bf16.msra.mxu0 0
      %371 = vmatprep.subr.bf16.mxu0 0
      %372 = vmatpush1.bf16.msra.mxu0 0
      %373 = vmatprep.subr.bf16.mxu0 0
      %374 = vmatpush1.bf16.msra.mxu0 0
      %375 = vmatprep.subr.bf16.mxu0 0
      %376 = vmatpush1.bf16.msra.mxu0 0
      %377 = vmatprep.subr.bf16.mxu0 0
      %378 = vmatpush1.bf16.msra.mxu0 0
      %379 = vmatprep.subr.bf16.mxu0 0
      %380 = vmatpush1.bf16.msra.mxu0 0
      %381 = vmatprep.subr.bf16.mxu0 0
      %382 = vmatpush1.bf16.msra.mxu0 0
      %383 = vmatprep.subr.bf16.mxu0 0
      %384 = vmatpush1.bf16.msra.mxu0 0
      %385 = vmatprep.subr.bf16.mxu0 0
      %386 = vmatpush1.bf16.msra.mxu0 0
      %387 = vmatprep.mubr.bf16.mxu0 0
      %388 = vmatmul.mubr.bf16.gmra.mrb[0].mxu0 %v349
      %v389 = vpop.f32.mrb[0].mxu0
      %v390 = vadd.f32 0.0, %v389
      %v391 = vpop.f32.mrb[0].mxu0
      %v392 = vpop.f32.mrb[0].mxu0
      %v393 = vadd.f32 0.0, %v392
      %v394 = vpop.f32.mrb[0].mxu0
      %395 = vdwg.mxu0
      %v397 = vsel %vm347, %v345, 0
      %v400 = vsel %vm351, %v259, 0
      %402 = vmatprep.subr.bf16.mxu0 0
      %403 = vmatpush1.bf16.msra.mxu0 %v400
      %404 = vmatprep.subr.bf16.mxu0 0
      %405 = vmatpush1.bf16.msra.mxu0 0
      %406 = vmatprep.subr.bf16.mxu0 0
      %407 = vmatpush1.bf16.msra.mxu0 0
      %408 = vmatprep.subr.bf16.mxu0 0
      %409 = vmatpush1.bf16.msra.mxu0 0
      %410 = vmatprep.subr.bf16.mxu0 0
      %411 = vmatpush1.bf16.msra.mxu0 0
      %412 = vmatprep.subr.bf16.mxu0 0
      %413 = vmatpush1.bf16.msra.mxu0 0
      %414 = vmatprep.subr.bf16.mxu0 0
      %415 = vmatpush1.bf16.msra.mxu0 0
      %416 = vmatprep.subr.bf16.mxu0 0
      %417 = vmatpush1.bf16.msra.mxu0 0
      %418 = vmatprep.subr.bf16.mxu0 0
      %419 = vmatpush1.bf16.msra.mxu0 0
      %420 = vmatprep.subr.bf16.mxu0 0
      %421 = vmatpush1.bf16.msra.mxu0 0
      %422 = vmatprep.subr.bf16.mxu0 0
      %423 = vmatpush1.bf16.msra.mxu0 0
      %424 = vmatprep.subr.bf16.mxu0 0
      %425 = vmatpush1.bf16.msra.mxu0 0
      %426 = vmatprep.subr.bf16.mxu0 0
      %427 = vmatpush1.bf16.msra.mxu0 0
      %428 = vmatprep.subr.bf16.mxu0 0
      %429 = vmatpush1.bf16.msra.mxu0 0
      %430 = vmatprep.subr.bf16.mxu0 0
      %431 = vmatpush1.bf16.msra.mxu0 0
      %432 = vmatprep.subr.bf16.mxu0 0
      %433 = vmatpush1.bf16.msra.mxu0 0
      %434 = vmatprep.mubr.bf16.mxu0 0
      %435 = vmatmul.mubr.bf16.gmra.mrb[0].mxu0 %v397
      %v436 = vpop.f32.mrb[0].mxu0
      %v437 = vadd.f32 %v390, %v436
      %v438 = vpop.f32.mrb[0].mxu0
      %v439 = vpop.f32.mrb[0].mxu0
      %v440 = vadd.f32 %v393, %v439
      %v441 = vpop.f32.mrb[0].mxu0
      %442 = vdwg.mxu0
      %v443 = vpack.c.bf16 %v344, %v341
      %v445 = vsel %vm347, %v443, 0
      %v448 = vsel %vm351, %v261, 0
      %450 = vmatprep.subr.bf16.mxu0 0
      %451 = vmatpush1.bf16.msra.mxu0 %v448
      %452 = vmatprep.subr.bf16.mxu0 0
      %453 = vmatpush1.bf16.msra.mxu0 0
      %454 = vmatprep.subr.bf16.mxu0 0
      %455 = vmatpush1.bf16.msra.mxu0 0
      %456 = vmatprep.subr.bf16.mxu0 0
      %457 = vmatpush1.bf16.msra.mxu0 0
      %458 = vmatprep.subr.bf16.mxu0 0
      %459 = vmatpush1.bf16.msra.mxu0 0
      %460 = vmatprep.subr.bf16.mxu0 0
      %461 = vmatpush1.bf16.msra.mxu0 0
      %462 = vmatprep.subr.bf16.mxu0 0
      %463 = vmatpush1.bf16.msra.mxu0 0
      %464 = vmatprep.subr.bf16.mxu0 0
      %465 = vmatpush1.bf16.msra.mxu0 0
      %466 = vmatprep.subr.bf16.mxu0 0
      %467 = vmatpush1.bf16.msra.mxu0 0
      %468 = vmatprep.subr.bf16.mxu0 0
      %469 = vmatpush1.bf16.msra.mxu0 0
      %470 = vmatprep.subr.bf16.mxu0 0
      %471 = vmatpush1.bf16.msra.mxu0 0
      %472 = vmatprep.subr.bf16.mxu0 0
      %473 = vmatpush1.bf16.msra.mxu0 0
      %474 = vmatprep.subr.bf16.mxu0 0
      %475 = vmatpush1.bf16.msra.mxu0 0
      %476 = vmatprep.subr.bf16.mxu0 0
      %477 = vmatpush1.bf16.msra.mxu0 0
      %478 = vmatprep.subr.bf16.mxu0 0
      %479 = vmatpush1.bf16.msra.mxu0 0
      %480 = vmatprep.subr.bf16.mxu0 0
      %481 = vmatpush1.bf16.msra.mxu0 0
      %482 = vmatprep.mubr.bf16.mxu0 0
      %483 = vmatmul.mubr.bf16.gmra.mrb[0].mxu0 %v445
      %v484 = vpop.f32.mrb[0].mxu0
      %v485 = vadd.f32 0.0, %v484
      %v486 = vpop.f32.mrb[0].mxu0
      %v487 = vpop.f32.mrb[0].mxu0
      %v488 = vadd.f32 0.0, %v487
      %v489 = vpop.f32.mrb[0].mxu0
      %490 = vdwg.mxu0
      %v491 = vadd.f32 %v437, %v485
      %v492 = vadd.f32 %v440, %v488
      %v494 = vlaneseq
      %v495 = vshrl.u32 %v494, 7
      %v496 = vsub.s32 0, %v495
      %v497 = vrot.slane %v262, %v496
      %v499 = vadd.f32 %v491, %v497
      %v500 = vadd.f32 %v492, %v497
      %vm501 = vcmask 31744
      %502 = vst.msk [vmem:[%s251] sm:$0xff] %vm501, %v499
      %503 = vst.msk [vmem:[%s251 + $0x8] sm:$0xff] %vm501, %v500
      %p504 = scmp.lt.s32.totalorder %s17, 1
      %s505 = scalar_select %p504, %s17, 1
      %s506 = smul.addr %s505, 2
      %s507 = smul.addr %s506, 8
      %s508 = scalar_lea.vmem %s6, %s507
      // Predicated region
      $region45: #{dec_conv_block.5} parent=43 // pred_check
        %p509 = pneg %p166
      $region46: #{dec_conv_block.5} parent=43 // pred_check_branch
        %511 = sbr.rel (%p509) target = $region48
      $region47: #{dec_conv_block.5} parent=43 // pred_region
        _
      $region48: #{dec_conv_block.5} parent=43 // pred_fallthru
        _
    $region44: #{dec_conv_block.5} parent=5 // pred_fallthru
      _
    %p512 = scmp.le.s32.totalorder 2, %s12
    // Predicated region
    $region49: #{dec_conv_block.5} parent=5 // pred_check
      %p513 = pneg %p512
    $region50: #{dec_conv_block.5} parent=5 // pred_check_branch
      %515 = sbr.rel (%p513) target = $region52
    $region51: #{dec_conv_block.5} parent=5 // pred_region
      %s516 = ssub.s32 %s12, 2
      // Predicated region
      $region53: #{dec_conv_block.5} parent=51 // pred_check
        %p517 = pneg %p172
      $region54: #{dec_conv_block.5} parent=51 // pred_check_branch
        %519 = sbr.rel (%p517) target = $region56
      $region55: #{dec_conv_block.5} parent=51 // pred_region
        %p520 = scmp.lt.s32.totalorder %s18, 1
        %s521 = scalar_select %p520, %s18, 1
        %s522 = smul.addr %s521, 2
        %s523 = smul.addr %s522, 8
        %s524 = scalar_lea.vmem %s6, %s523
      $region56: #{dec_conv_block.5} parent=51 // pred_fallthru
        _
    $region52: #{dec_conv_block.5} parent=5 // pred_fallthru
      _
  $region6: #{dec_conv_block.5} parent=0 // loop_footer
    %s16 = sadd.s32 1, %s12
  $region7: #{dec_conv_block.5} parent=0 // loop_footer_branch
    %11 = sbr.rel target = $region3
  $region8: #{dec_conv_block.5} parent=0 // loop_exit
    _

</llo_original>
